<compile_context>
chip_gen: v5e
topology: v5e:2x2
jax: 0.10.0
libtpu: 0.0.40
codegen_flags: <defaults>
</compile_context>

<pallas_src>
import functools
import math

import jax
import jax.numpy as jnp
from jax.experimental import pallas as pl
from jax.experimental.pallas import tpu as pltpu


_MXU_DTYPE = jnp.bfloat16       # MXU operand dtype; accumulation stays float32
_LN_EPS = 1e-5


def _cparams():
    return pltpu.CompilerParams(
        dimension_semantics=("parallel",),
        vmem_limit_bytes=48 * 1024 * 1024,   # conservative for v7x's 64 MiB/TC
    )


def _layernorm(y, g, b, eps):
    mu = jnp.mean(y, axis=-1, keepdims=True)
    yc = y - mu
    var = jnp.mean(yc * yc, axis=-1, keepdims=True)
    return yc * jax.lax.rsqrt(var + eps) * g + b


# ----------------------------------------------------------------------------
# Fused post-norm encoder layer: one batch element per grid step.
# ----------------------------------------------------------------------------
def _encoder_layer_kernel(x_ref, wqkv_ref, bqkv_ref, wo_ref, bo_ref,
                          g1_ref, beta1_ref, w1_ref, b1_ref, w2_ref, b2_ref,
                          g2_ref, beta2_ref, o_ref, attn_ref, *, nhead, eps):
    S = x_ref.shape[1]
    D = o_ref.shape[2]
    Dh = D // nhead
    scale = 1.0 / math.sqrt(Dh)

    x = x_ref[0].astype(jnp.float32)                                    # [S, D]

    # --- QKV projection (in_proj fused into the layer; no HBM round-trip)
    qkv = jnp.dot(x.astype(_MXU_DTYPE), wqkv_ref[...],
                  preferred_element_type=jnp.float32) + bqkv_ref[...]   # [S, 3D]

    # TODO(synk): no flash-style KV tiling; the per-head fp32 [S, S] score
    # matrix must fit VMEM (fine at these sizes, revisit for S >~ 2K).
    for h in range(nhead):                                              # static, small
        q = qkv[:, h * Dh:(h + 1) * Dh].astype(_MXU_DTYPE)
        k = qkv[:, D + h * Dh:D + (h + 1) * Dh].astype(_MXU_DTYPE)
        v = qkv[:, 2 * D + h * Dh:2 * D + (h + 1) * Dh].astype(_MXU_DTYPE)
        s = jax.lax.dot_general(q, k, (((1,), (1,)), ((), ())),
                                preferred_element_type=jnp.float32) * scale
        s = s - jnp.max(s, axis=-1, keepdims=True)
        p = jnp.exp(s)
        p = p / jnp.sum(p, axis=-1, keepdims=True)
        # store the head output directly into its lane slice of the VMEM scratch
        attn_ref[:, h * Dh:(h + 1) * Dh] = jnp.dot(
            p.astype(_MXU_DTYPE), v,
            preferred_element_type=jnp.float32).astype(attn_ref.dtype)

    # --- out_proj + residual + LayerNorm1
    a = jnp.dot(attn_ref[...], wo_ref[...],
                preferred_element_type=jnp.float32) + bo_ref[...]
    y = _layernorm(a + x, g1_ref[...], beta1_ref[...], eps)

    # --- FFN (relu) + residual + LayerNorm2; dff-wide intermediate stays in VMEM
    h1 = jnp.dot(y.astype(_MXU_DTYPE), w1_ref[...],
                 preferred_element_type=jnp.float32) + b1_ref[...]
    h1 = jnp.maximum(h1, 0.0)
    z = jnp.dot(h1.astype(_MXU_DTYPE), w2_ref[...],
                preferred_element_type=jnp.float32) + b2_ref[...] + y
    o_ref[0] = _layernorm(z, g2_ref[...], beta2_ref[...], eps).astype(o_ref.dtype)


def encoder_layer(x, p, nhead):
    """Post-norm TransformerEncoderLayer (relu FFN), fully fused. x: [B, S, D] f32."""
    B, S, D = x.shape

    def resident(a):
        # TODO(synk): grid-invariant blocks could be single-buffered via
        # pipeline_mode=pl.Buffered(1); kept default for portability.
        nd = a.ndim
        return pl.BlockSpec(a.shape, lambda b: (0,) * nd)

    args = [
        x,
        p["in_proj_w"], p["in_proj_b"].reshape(1, -1),
        p["out_proj_w"], p["out_proj_b"].reshape(1, -1),
        p["ln1_g"].reshape(1, -1), p["ln1_b"].reshape(1, -1),
        p["ff1_w"], p["ff1_b"].reshape(1, -1),
        p["ff2_w"], p["ff2_b"].reshape(1, -1),
        p["ln2_g"].reshape(1, -1), p["ln2_b"].reshape(1, -1),
    ]
    in_specs = [pl.BlockSpec((1, S, D), lambda b: (b, 0, 0))]
    in_specs += [resident(a) for a in args[1:]]
    return pl.pallas_call(
        functools.partial(_encoder_layer_kernel, nhead=nhead, eps=_LN_EPS),
        out_shape=jax.ShapeDtypeStruct((B, S, D), jnp.float32),
        grid=(B,),
        in_specs=in_specs,
        out_specs=pl.BlockSpec((1, S, D), lambda b: (b, 0, 0)),
        scratch_shapes=[pltpu.VMEM((S, D), _MXU_DTYPE)],   # attention output slab
        compiler_params=_cparams(),
    )(*args)


# ----------------------------------------------------------------------------
# Fused encoder-final LayerNorm + fc1..fc4 head (applied to seq position 0 only).
# ----------------------------------------------------------------------------
def _final_head_kernel(x_ref, g_ref, b_ref,
                       w1_ref, b1_ref, w2_ref, b2_ref,
                       w3_ref, b3_ref, w4_ref, b4_ref, o_ref, *, eps):
    h = _layernorm(x_ref[...].astype(jnp.float32), g_ref[...], b_ref[...], eps)

    def fc(h, w_ref, bias_ref, relu):
        y = jnp.dot(h.astype(_MXU_DTYPE), w_ref[...],
                    preferred_element_type=jnp.float32) + bias_ref[...]
        return jnp.maximum(y, 0.0) if relu else y

    h = fc(h, w1_ref, b1_ref, True)
    h = fc(h, w2_ref, b2_ref, True)
    h = fc(h, w3_ref, b3_ref, True)
    o_ref[...] = fc(h, w4_ref, b4_ref, False).astype(o_ref.dtype)


def final_norm_head(info, params):
    """LayerNorm + fc1..fc4 (relu,relu,relu,none) fused; info:[B, D] -> [B, 2]."""
    B, _ = info.shape

    def full(a):
        nd = a.ndim
        return pl.BlockSpec(a.shape, lambda i: (0,) * nd)

    args = [info,
            params["enc_norm_g"].reshape(1, -1), params["enc_norm_b"].reshape(1, -1)]
    for name in ("fc1", "fc2", "fc3", "fc4"):
        args += [params[name + "_w"], params[name + "_b"].reshape(1, -1)]
    n_out = params["fc4_w"].shape[1]
    return pl.pallas_call(
        functools.partial(_final_head_kernel, eps=_LN_EPS),
        out_shape=jax.ShapeDtypeStruct((B, n_out), jnp.float32),
        grid=(1,),
        in_specs=[full(a) for a in args],
        out_specs=pl.BlockSpec((B, n_out), lambda i: (0, 0)),
        compiler_params=_cparams(),
    )(*args)


# ----------------------------------------------------------------------------
# Model glue (plain JAX): embeddings, PE table, bar-distance matrix, wiring
# ----------------------------------------------------------------------------
def bar_distance_matrix(src, bar_id, max_distance):
    """Vectorized calculate_distances_matrix + clip_matrix."""
    B, S = src.shape
    pos = jnp.arange(S, dtype=jnp.int32)
    is_bar = src == bar_id
    idx = jnp.where(is_bar, pos[None, :], -1)
    last = jax.lax.cummax(idx, axis=1)                    # last bar index <= j
    dist = jnp.where(last >= 0, pos[None, :] - last, max_distance)
    return jnp.minimum(dist, max_distance)                # clip_matrix


def sinusoidal_pe(max_len, d_model):
    pos = jnp.arange(max_len, dtype=jnp.float32)[:, None]
    div = jnp.exp(jnp.arange(0, d_model, 2, dtype=jnp.float32)
                  * (-math.log(10000.0) / d_model))
    pe = jnp.zeros((max_len, d_model), jnp.float32)
    pe = pe.at[:, 0::2].set(jnp.sin(pos * div))
    pe = pe.at[:, 1::2].set(jnp.cos(pos * div))
    return pe


def rhythm_discriminator_forward(src, params, *, bar_id, max_distance, nhead):
    """src: [B, S] int token ids  ->  [B, 2] logits (forward() semantics, eval)."""
    B, S = src.shape

    rpe_mat = bar_distance_matrix(src, bar_id, max_distance)             # [B, S]
    rpe = jnp.take(params["rpe_emb"], rpe_mat, axis=0)                   # [B, S, D]
    x = jnp.take(params["tok_emb"], src, axis=0)                         # [B, S, D]
    x = x + params["pe"][:S][None, :, :] + rpe                           # pos_enc + rpe; dropout = id

    for layer_p in params["layers"]:
        x = encoder_layer(x, layer_p, nhead)                             # fused layer

    info = x[:, 0, :]   # only seq position 0 feeds the head -> final LN fused there
    return final_norm_head(info, params)


# ----------------------------------------------------------------------------
# Deterministic parameter construction (synthetic, not a checkpoint)
# ----------------------------------------------------------------------------
def init_params(key, n_tokens, d_model, nhead, num_layers, dff, max_distance, max_len):
    ks = iter(jax.random.split(key, 128))

    def dense(fan_in, fan_out):
        scale = 1.0 / math.sqrt(fan_in)
        w = jax.random.uniform(next(ks), (fan_in, fan_out), jnp.float32, -scale, scale)
        return w.astype(_MXU_DTYPE)        # pre-cast once: no per-step VPU convert

    layers = []
    for _ in range(num_layers):
        layers.append({
            "in_proj_w": dense(d_model, 3 * d_model),
            "in_proj_b": jnp.zeros((3 * d_model,), jnp.float32),
            "out_proj_w": dense(d_model, d_model),
            "out_proj_b": jnp.zeros((d_model,), jnp.float32),
            "ff1_w": dense(d_model, dff),
            "ff1_b": jnp.zeros((dff,), jnp.float32),
            "ff2_w": dense(dff, d_model),
            "ff2_b": jnp.zeros((d_model,), jnp.float32),
            "ln1_g": jnp.ones((d_model,), jnp.float32),
            "ln1_b": jnp.zeros((d_model,), jnp.float32),
            "ln2_g": jnp.ones((d_model,), jnp.float32),
            "ln2_b": jnp.zeros((d_model,), jnp.float32),
        })

    return {
        "tok_emb": 0.02 * jax.random.normal(next(ks), (n_tokens, d_model), jnp.float32),
        "rpe_emb": 0.02 * jax.random.normal(next(ks), (max_distance + 1, d_model), jnp.float32),
        "pe": sinusoidal_pe(max_len, d_model),
        "layers": layers,
        "enc_norm_g": jnp.ones((d_model,), jnp.float32),
        "enc_norm_b": jnp.zeros((d_model,), jnp.float32),
        "fc1_w": dense(d_model, 4 * d_model),
        "fc1_b": jnp.zeros((4 * d_model,), jnp.float32),
        "fc2_w": dense(4 * d_model, d_model),
        "fc2_b": jnp.zeros((d_model,), jnp.float32),
        "fc3_w": dense(d_model, d_model // 4),
        "fc3_b": jnp.zeros((d_model // 4,), jnp.float32),
        "fc4_w": dense(d_model // 4, 2),
        "fc4_b": jnp.zeros((2,), jnp.float32),
    }


if __name__ == "__main__":
    # Small shapes consistent with the module (scaled down from d_model=256).
    d_model, nhead, num_layers, dff = 32, 4, 2, 64
    max_distance = 63
    n_tokens = 16          # synthetic vocab size
    bar_id = 3             # synthetic vocab.token2id['Bar']
    B, S = 2, 8

    key = jax.random.PRNGKey(0)
    pkey, skey = jax.random.split(key)
    params = init_params(pkey, n_tokens, d_model, nhead, num_layers,
                         dff, max_distance, max_len=S)
    src = jax.random.randint(skey, (B, S), 0, n_tokens, dtype=jnp.int32)

    fwd = jax.jit(functools.partial(rhythm_discriminator_forward,
                                    bar_id=bar_id, max_distance=max_distance,
                                    nhead=nhead))
    out = fwd(src, params)
    jax.block_until_ready(out)
    assert out.shape == (B, 2)
    print("KERNEL_OK")
</pallas_src>

<mosaic_0001>
module attributes {stable_mosaic.version = 11 : i64} {
  func.func @_final_head_kernel(%arg0: i32, %arg1: memref<2x32xf32, #tpu.memory_space<vmem>>, %arg2: memref<1x32xf32, #tpu.memory_space<vmem>>, %arg3: memref<1x32xf32, #tpu.memory_space<vmem>>, %arg4: memref<32x128xbf16, #tpu.memory_space<vmem>>, %arg5: memref<1x128xf32, #tpu.memory_space<vmem>>, %arg6: memref<128x32xbf16, #tpu.memory_space<vmem>>, %arg7: memref<1x32xf32, #tpu.memory_space<vmem>>, %arg8: memref<32x8xbf16, #tpu.memory_space<vmem>>, %arg9: memref<1x8xf32, #tpu.memory_space<vmem>>, %arg10: memref<8x2xbf16, #tpu.memory_space<vmem>>, %arg11: memref<1x2xf32, #tpu.memory_space<vmem>>, %arg12: memref<2x2xf32, #tpu.memory_space<vmem>>) attributes {dimension_semantics = [#tpu.dimension_semantics<parallel>], iteration_bounds = array<i64: 1>, scalar_prefetch = 0 : i64, scratch_operands = 0 : i64, tpu.core_type = #tpu.core_type<tc>, window_params = [{pipeline_mode = #tpu.pipeline_mode<synchronous>, transform_indices = @transform_0, window_bounds = array<i64: 2, 32>}, {pipeline_mode = #tpu.pipeline_mode<synchronous>, transform_indices = @transform_1, window_bounds = array<i64: 1, 32>}, {pipeline_mode = #tpu.pipeline_mode<synchronous>, transform_indices = @transform_2, window_bounds = array<i64: 1, 32>}, {pipeline_mode = #tpu.pipeline_mode<synchronous>, transform_indices = @transform_3, window_bounds = array<i64: 32, 128>}, {pipeline_mode = #tpu.pipeline_mode<synchronous>, transform_indices = @transform_4, window_bounds = array<i64: 1, 128>}, {pipeline_mode = #tpu.pipeline_mode<synchronous>, transform_indices = @transform_5, window_bounds = array<i64: 128, 32>}, {pipeline_mode = #tpu.pipeline_mode<synchronous>, transform_indices = @transform_6, window_bounds = array<i64: 1, 32>}, {pipeline_mode = #tpu.pipeline_mode<synchronous>, transform_indices = @transform_7, window_bounds = array<i64: 32, 8>}, {pipeline_mode = #tpu.pipeline_mode<synchronous>, transform_indices = @transform_8, window_bounds = array<i64: 1, 8>}, {pipeline_mode = #tpu.pipeline_mode<synchronous>, transform_indices = @transform_9, window_bounds = array<i64: 8, 2>}, {pipeline_mode = #tpu.pipeline_mode<synchronous>, transform_indices = @transform_10, window_bounds = array<i64: 1, 2>}, {pipeline_mode = #tpu.pipeline_mode<synchronous>, transform_indices = @transform_11, window_bounds = array<i64: 2, 2>}]} {
    %c0 = arith.constant 0 : index
    %c0_0 = arith.constant 0 : index
    %0 = vector.load %arg1[%c0, %c0_0] : memref<2x32xf32, #tpu.memory_space<vmem>>, vector<2x32xf32>
    %c0_1 = arith.constant 0 : index
    %c0_2 = arith.constant 0 : index
    %1 = vector.load %arg2[%c0_1, %c0_2] : memref<1x32xf32, #tpu.memory_space<vmem>>, vector<1x32xf32>
    %c0_3 = arith.constant 0 : index
    %c0_4 = arith.constant 0 : index
    %2 = vector.load %arg3[%c0_3, %c0_4] : memref<1x32xf32, #tpu.memory_space<vmem>>, vector<1x32xf32>
    %cst = arith.constant dense<0.000000e+00> : vector<2xf32>
    %3 = vector.multi_reduction <add>, %0, %cst [1] : vector<2x32xf32> to vector<2xf32>
    %4 = vector.shape_cast %3 : vector<2xf32> to vector<2x1xf32>
    %cst_5 = arith.constant 3.200000e+01 : f32
    %5 = vector.broadcast %cst_5 : f32 to vector<2x1xf32>
    %6 = arith.divf %4, %5 : vector<2x1xf32>
    %7 = vector.broadcast %6 : vector<2x1xf32> to vector<2x32xf32>
    %8 = arith.subf %0, %7 : vector<2x32xf32>
    %9 = arith.mulf %8, %8 : vector<2x32xf32>
    %cst_6 = arith.constant dense<0.000000e+00> : vector<2xf32>
    %10 = vector.multi_reduction <add>, %9, %cst_6 [1] : vector<2x32xf32> to vector<2xf32>
    %11 = vector.shape_cast %10 : vector<2xf32> to vector<2x1xf32>
    %cst_7 = arith.constant 3.200000e+01 : f32
    %12 = vector.broadcast %cst_7 : f32 to vector<2x1xf32>
    %13 = arith.divf %11, %12 : vector<2x1xf32>
    %cst_8 = arith.constant 9.99999974E-6 : f32
    %14 = vector.broadcast %cst_8 : f32 to vector<2x1xf32>
    %15 = arith.addf %13, %14 : vector<2x1xf32>
    %16 = math.rsqrt %15 : vector<2x1xf32>
    %17 = vector.broadcast %16 : vector<2x1xf32> to vector<2x32xf32>
    %18 = arith.mulf %8, %17 : vector<2x32xf32>
    %19 = vector.broadcast %1 : vector<1x32xf32> to vector<2x32xf32>
    %20 = arith.mulf %18, %19 : vector<2x32xf32>
    %21 = vector.broadcast %2 : vector<1x32xf32> to vector<2x32xf32>
    %22 = arith.addf %20, %21 : vector<2x32xf32>
    %23 = arith.truncf %22 : vector<2x32xf32> to vector<2x32xbf16>
    %c0_9 = arith.constant 0 : index
    %c0_10 = arith.constant 0 : index
    %24 = vector.load %arg4[%c0_9, %c0_10] : memref<32x128xbf16, #tpu.memory_space<vmem>>, vector<32x128xbf16>
    %cst_11 = arith.constant dense<0.000000e+00> : vector<2x128xf32>
    %25 = tpu.matmul %23, %24, %cst_11 {dimension_numbers = #tpu.dot_dimension_numbers<[1], [0], [0], [1], [0, 0, 1, 1], [], []>} : vector<2x32xbf16>, vector<32x128xbf16>, vector<2x128xf32> -> vector<2x128xf32>
    %c0_12 = arith.constant 0 : index
    %c0_13 = arith.constant 0 : index
    %26 = vector.load %arg5[%c0_12, %c0_13] : memref<1x128xf32, #tpu.memory_space<vmem>>, vector<1x128xf32>
    %27 = vector.broadcast %26 : vector<1x128xf32> to vector<2x128xf32>
    %28 = arith.addf %25, %27 : vector<2x128xf32>
    %cst_14 = arith.constant 0.000000e+00 : f32
    %29 = vector.broadcast %cst_14 : f32 to vector<2x128xf32>
    %30 = arith.maximumf %28, %29 : vector<2x128xf32>
    %31 = arith.truncf %30 : vector<2x128xf32> to vector<2x128xbf16>
    %c0_15 = arith.constant 0 : index
    %c0_16 = arith.constant 0 : index
    %32 = vector.load %arg6[%c0_15, %c0_16] : memref<128x32xbf16, #tpu.memory_space<vmem>>, vector<128x32xbf16>
    %cst_17 = arith.constant dense<0.000000e+00> : vector<2x32xf32>
    %33 = tpu.matmul %31, %32, %cst_17 {dimension_numbers = #tpu.dot_dimension_numbers<[1], [0], [0], [1], [0, 0, 1, 1], [], []>} : vector<2x128xbf16>, vector<128x32xbf16>, vector<2x32xf32> -> vector<2x32xf32>
    %c0_18 = arith.constant 0 : index
    %c0_19 = arith.constant 0 : index
    %34 = vector.load %arg7[%c0_18, %c0_19] : memref<1x32xf32, #tpu.memory_space<vmem>>, vector<1x32xf32>
    %35 = vector.broadcast %34 : vector<1x32xf32> to vector<2x32xf32>
    %36 = arith.addf %33, %35 : vector<2x32xf32>
    %cst_20 = arith.constant 0.000000e+00 : f32
    %37 = vector.broadcast %cst_20 : f32 to vector<2x32xf32>
    %38 = arith.maximumf %36, %37 : vector<2x32xf32>
    %39 = arith.truncf %38 : vector<2x32xf32> to vector<2x32xbf16>
    %c0_21 = arith.constant 0 : index
    %c0_22 = arith.constant 0 : index
    %40 = vector.load %arg8[%c0_21, %c0_22] : memref<32x8xbf16, #tpu.memory_space<vmem>>, vector<32x8xbf16>
    %cst_23 = arith.constant dense<0.000000e+00> : vector<2x8xf32>
    %41 = tpu.matmul %39, %40, %cst_23 {dimension_numbers = #tpu.dot_dimension_numbers<[1], [0], [0], [1], [0, 0, 1, 1], [], []>} : vector<2x32xbf16>, vector<32x8xbf16>, vector<2x8xf32> -> vector<2x8xf32>
    %c0_24 = arith.constant 0 : index
    %c0_25 = arith.constant 0 : index
    %42 = vector.load %arg9[%c0_24, %c0_25] : memref<1x8xf32, #tpu.memory_space<vmem>>, vector<1x8xf32>
    %43 = vector.broadcast %42 : vector<1x8xf32> to vector<2x8xf32>
    %44 = arith.addf %41, %43 : vector<2x8xf32>
    %cst_26 = arith.constant 0.000000e+00 : f32
    %45 = vector.broadcast %cst_26 : f32 to vector<2x8xf32>
    %46 = arith.maximumf %44, %45 : vector<2x8xf32>
    %47 = arith.truncf %46 : vector<2x8xf32> to vector<2x8xbf16>
    %c0_27 = arith.constant 0 : index
    %c0_28 = arith.constant 0 : index
    %48 = vector.load %arg10[%c0_27, %c0_28] : memref<8x2xbf16, #tpu.memory_space<vmem>>, vector<8x2xbf16>
    %cst_29 = arith.constant dense<0.000000e+00> : vector<2x2xf32>
    %49 = tpu.matmul %47, %48, %cst_29 {dimension_numbers = #tpu.dot_dimension_numbers<[1], [0], [0], [1], [0, 0, 1, 1], [], []>} : vector<2x8xbf16>, vector<8x2xbf16>, vector<2x2xf32> -> vector<2x2xf32>
    %c0_30 = arith.constant 0 : index
    %c0_31 = arith.constant 0 : index
    %50 = vector.load %arg11[%c0_30, %c0_31] : memref<1x2xf32, #tpu.memory_space<vmem>>, vector<1x2xf32>
    %51 = vector.broadcast %50 : vector<1x2xf32> to vector<2x2xf32>
    %52 = arith.addf %49, %51 : vector<2x2xf32>
    %c0_32 = arith.constant 0 : index
    %c0_33 = arith.constant 0 : index
    %53 = vector.load %arg12[%c0_32, %c0_33] : memref<2x2xf32, #tpu.memory_space<vmem>>, vector<2x2xf32>
    tpu.vector_store %arg12[%c0_32, %c0_33], %52 {strides = array<i32>} : memref<2x2xf32, #tpu.memory_space<vmem>>, vector<2x2xf32>,
    return
  }
  func.func @transform_0(%arg0: i32) -> (i32, i32) {
    %c0_i32 = arith.constant 0 : i32
    %c0_i32_0 = arith.constant 0 : i32
    %c0_i32_1 = arith.constant 0 : i32
    return %c0_i32, %c0_i32_0 : i32, i32
  }
  func.func @transform_1(%arg0: i32) -> (i32, i32) {
    %c0_i32 = arith.constant 0 : i32
    %c0_i32_0 = arith.constant 0 : i32
    %c0_i32_1 = arith.constant 0 : i32
    return %c0_i32, %c0_i32_0 : i32, i32
  }
  func.func @transform_2(%arg0: i32) -> (i32, i32) {
    %c0_i32 = arith.constant 0 : i32
    %c0_i32_0 = arith.constant 0 : i32
    %c0_i32_1 = arith.constant 0 : i32
    return %c0_i32, %c0_i32_0 : i32, i32
  }
  func.func @transform_3(%arg0: i32) -> (i32, i32) {
    %c0_i32 = arith.constant 0 : i32
    %c0_i32_0 = arith.constant 0 : i32
    %c0_i32_1 = arith.constant 0 : i32
    return %c0_i32, %c0_i32_0 : i32, i32
  }
  func.func @transform_4(%arg0: i32) -> (i32, i32) {
    %c0_i32 = arith.constant 0 : i32
    %c0_i32_0 = arith.constant 0 : i32
    %c0_i32_1 = arith.constant 0 : i32
    return %c0_i32, %c0_i32_0 : i32, i32
  }
  func.func @transform_5(%arg0: i32) -> (i32, i32) {
    %c0_i32 = arith.constant 0 : i32
    %c0_i32_0 = arith.constant 0 : i32
    %c0_i32_1 = arith.constant 0 : i32
    return %c0_i32, %c0_i32_0 : i32, i32
  }
  func.func @transform_6(%arg0: i32) -> (i32, i32) {
    %c0_i32 = arith.constant 0 : i32
    %c0_i32_0 = arith.constant 0 : i32
    %c0_i32_1 = arith.constant 0 : i32
    return %c0_i32, %c0_i32_0 : i32, i32
  }
  func.func @transform_7(%arg0: i32) -> (i32, i32) {
    %c0_i32 = arith.constant 0 : i32
    %c0_i32_0 = arith.constant 0 : i32
    %c0_i32_1 = arith.constant 0 : i32
    return %c0_i32, %c0_i32_0 : i32, i32
  }
  func.func @transform_8(%arg0: i32) -> (i32, i32) {
    %c0_i32 = arith.constant 0 : i32
    %c0_i32_0 = arith.constant 0 : i32
    %c0_i32_1 = arith.constant 0 : i32
    return %c0_i32, %c0_i32_0 : i32, i32
  }
  func.func @transform_9(%arg0: i32) -> (i32, i32) {
    %c0_i32 = arith.constant 0 : i32
    %c0_i32_0 = arith.constant 0 : i32
    %c0_i32_1 = arith.constant 0 : i32
    return %c0_i32, %c0_i32_0 : i32, i32
  }
  func.func @transform_10(%arg0: i32) -> (i32, i32) {
    %c0_i32 = arith.constant 0 : i32
    %c0_i32_0 = arith.constant 0 : i32
    %c0_i32_1 = arith.constant 0 : i32
    return %c0_i32, %c0_i32_0 : i32, i32
  }
  func.func @transform_11(%arg0: i32) -> (i32, i32) {
    %c0_i32 = arith.constant 0 : i32
    %c0_i32_0 = arith.constant 0 : i32
    %c0_i32_1 = arith.constant 0 : i32
    return %c0_i32, %c0_i32_0 : i32, i32
  }
}

module attributes {stable_mosaic.version = 11 : i64} {
  func.func @_encoder_layer_kernel(%arg0: i32, %arg1: memref<1x8x32xf32, #tpu.memory_space<vmem>>, %arg2: memref<32x96xbf16, #tpu.memory_space<vmem>>, %arg3: memref<1x96xf32, #tpu.memory_space<vmem>>, %arg4: memref<32x32xbf16, #tpu.memory_space<vmem>>, %arg5: memref<1x32xf32, #tpu.memory_space<vmem>>, %arg6: memref<1x32xf32, #tpu.memory_space<vmem>>, %arg7: memref<1x32xf32, #tpu.memory_space<vmem>>, %arg8: memref<32x64xbf16, #tpu.memory_space<vmem>>, %arg9: memref<1x64xf32, #tpu.memory_space<vmem>>, %arg10: memref<64x32xbf16, #tpu.memory_space<vmem>>, %arg11: memref<1x32xf32, #tpu.memory_space<vmem>>, %arg12: memref<1x32xf32, #tpu.memory_space<vmem>>, %arg13: memref<1x32xf32, #tpu.memory_space<vmem>>, %arg14: memref<1x8x32xf32, #tpu.memory_space<vmem>>, %arg15: memref<8x32xbf16, #tpu.memory_space<vmem>>) attributes {dimension_semantics = [#tpu.dimension_semantics<parallel>], iteration_bounds = array<i64: 2>, scalar_prefetch = 0 : i64, scratch_operands = 1 : i64, tpu.core_type = #tpu.core_type<tc>, window_params = [{transform_indices = @transform_0, window_bounds = array<i64: 1, 8, 32>}, {pipeline_mode = #tpu.pipeline_mode<synchronous>, transform_indices = @transform_1, window_bounds = array<i64: 32, 96>}, {pipeline_mode = #tpu.pipeline_mode<synchronous>, transform_indices = @transform_2, window_bounds = array<i64: 1, 96>}, {pipeline_mode = #tpu.pipeline_mode<synchronous>, transform_indices = @transform_3, window_bounds = array<i64: 32, 32>}, {pipeline_mode = #tpu.pipeline_mode<synchronous>, transform_indices = @transform_4, window_bounds = array<i64: 1, 32>}, {pipeline_mode = #tpu.pipeline_mode<synchronous>, transform_indices = @transform_5, window_bounds = array<i64: 1, 32>}, {pipeline_mode = #tpu.pipeline_mode<synchronous>, transform_indices = @transform_6, window_bounds = array<i64: 1, 32>}, {pipeline_mode = #tpu.pipeline_mode<synchronous>, transform_indices = @transform_7, window_bounds = array<i64: 32, 64>}, {pipeline_mode = #tpu.pipeline_mode<synchronous>, transform_indices = @transform_8, window_bounds = array<i64: 1, 64>}, {pipeline_mode = #tpu.pipeline_mode<synchronous>, transform_indices = @transform_9, window_bounds = array<i64: 64, 32>}, {pipeline_mode = #tpu.pipeline_mode<synchronous>, transform_indices = @transform_10, window_bounds = array<i64: 1, 32>}, {pipeline_mode = #tpu.pipeline_mode<synchronous>, transform_indices = @transform_11, window_bounds = array<i64: 1, 32>}, {pipeline_mode = #tpu.pipeline_mode<synchronous>, transform_indices = @transform_12, window_bounds = array<i64: 1, 32>}, {transform_indices = @transform_13, window_bounds = array<i64: 1, 8, 32>}]} {
    %c0 = arith.constant 0 : index
    %c0_0 = arith.constant 0 : index
    %c0_1 = arith.constant 0 : index
    %0 = vector.load %arg1[%c0, %c0_0, %c0_1] : memref<1x8x32xf32, #tpu.memory_space<vmem>>, vector<1x8x32xf32>
    %1 = vector.shape_cast %0 : vector<1x8x32xf32> to vector<8x32xf32>
    %2 = arith.truncf %1 : vector<8x32xf32> to vector<8x32xbf16>
    %c0_2 = arith.constant 0 : index
    %c0_3 = arith.constant 0 : index
    %3 = vector.load %arg2[%c0_2, %c0_3] : memref<32x96xbf16, #tpu.memory_space<vmem>>, vector<32x96xbf16>
    %cst = arith.constant dense<0.000000e+00> : vector<8x96xf32>
    %4 = tpu.matmul %2, %3, %cst {dimension_numbers = #tpu.dot_dimension_numbers<[1], [0], [0], [1], [0, 0, 1, 1], [], []>} : vector<8x32xbf16>, vector<32x96xbf16>, vector<8x96xf32> -> vector<8x96xf32>
    %c0_4 = arith.constant 0 : index
    %c0_5 = arith.constant 0 : index
    %5 = vector.load %arg3[%c0_4, %c0_5] : memref<1x96xf32, #tpu.memory_space<vmem>>, vector<1x96xf32>
    %6 = vector.broadcast %5 : vector<1x96xf32> to vector<8x96xf32>
    %7 = arith.addf %4, %6 : vector<8x96xf32>
    %8 = vector.extract_strided_slice %7 {offsets = [0, 0], sizes = [8, 8], strides = [1, 1]} : vector<8x96xf32> to vector<8x8xf32>
    %9 = arith.truncf %8 : vector<8x8xf32> to vector<8x8xbf16>
    %10 = vector.extract_strided_slice %7 {offsets = [0, 32], sizes = [8, 8], strides = [1, 1]} : vector<8x96xf32> to vector<8x8xf32>
    %11 = arith.truncf %10 : vector<8x8xf32> to vector<8x8xbf16>
    %12 = vector.extract_strided_slice %7 {offsets = [0, 64], sizes = [8, 8], strides = [1, 1]} : vector<8x96xf32> to vector<8x8xf32>
    %13 = arith.truncf %12 : vector<8x8xf32> to vector<8x8xbf16>
    %cst_6 = arith.constant dense<0.000000e+00> : vector<8x8xf32>
    %14 = tpu.matmul %9, %11, %cst_6 {dimension_numbers = #tpu.dot_dimension_numbers<[1], [1], [0], [0], [0, 0, 1, 0], [], []>} : vector<8x8xbf16>, vector<8x8xbf16>, vector<8x8xf32> -> vector<8x8xf32>
    %cst_7 = arith.constant 0.353553385 : f32
    %15 = vector.broadcast %cst_7 : f32 to vector<8x8xf32>
    %16 = arith.mulf %14, %15 : vector<8x8xf32>
    %cst_8 = arith.constant dense<0xFF800000> : vector<8xf32>
    %17 = vector.multi_reduction <maximumf>, %16, %cst_8 [1] : vector<8x8xf32> to vector<8xf32>
    %18 = vector.shape_cast %17 : vector<8xf32> to vector<8x1xf32>
    %19 = vector.broadcast %18 : vector<8x1xf32> to vector<8x8xf32>
    %20 = arith.subf %16, %19 : vector<8x8xf32>
    %21 = math.exp %20 : vector<8x8xf32>
    %cst_9 = arith.constant dense<0.000000e+00> : vector<8xf32>
    %22 = vector.multi_reduction <add>, %21, %cst_9 [1] : vector<8x8xf32> to vector<8xf32>
    %23 = vector.shape_cast %22 : vector<8xf32> to vector<8x1xf32>
    %24 = vector.broadcast %23 : vector<8x1xf32> to vector<8x8xf32>
    %25 = arith.divf %21, %24 : vector<8x8xf32>
    %26 = arith.truncf %25 : vector<8x8xf32> to vector<8x8xbf16>
    %cst_10 = arith.constant dense<0.000000e+00> : vector<8x8xf32>
    %27 = tpu.matmul %26, %13, %cst_10 {dimension_numbers = #tpu.dot_dimension_numbers<[1], [0], [0], [1], [0, 0, 1, 1], [], []>} : vector<8x8xbf16>, vector<8x8xbf16>, vector<8x8xf32> -> vector<8x8xf32>
    %28 = arith.truncf %27 : vector<8x8xf32> to vector<8x8xbf16>
    %c0_11 = arith.constant 0 : index
    %c0_12 = arith.constant 0 : index
    %29 = vector.load %arg15[%c0_11, %c0_12] : memref<8x32xbf16, #tpu.memory_space<vmem>>, vector<8x8xbf16>
    tpu.vector_store %arg15[%c0_11, %c0_12], %28 {strides = array<i32>} : memref<8x32xbf16, #tpu.memory_space<vmem>>, vector<8x8xbf16>,
    %30 = vector.extract_strided_slice %7 {offsets = [0, 8], sizes = [8, 8], strides = [1, 1]} : vector<8x96xf32> to vector<8x8xf32>
    %31 = arith.truncf %30 : vector<8x8xf32> to vector<8x8xbf16>
    %32 = vector.extract_strided_slice %7 {offsets = [0, 40], sizes = [8, 8], strides = [1, 1]} : vector<8x96xf32> to vector<8x8xf32>
    %33 = arith.truncf %32 : vector<8x8xf32> to vector<8x8xbf16>
    %34 = vector.extract_strided_slice %7 {offsets = [0, 72], sizes = [8, 8], strides = [1, 1]} : vector<8x96xf32> to vector<8x8xf32>
    %35 = arith.truncf %34 : vector<8x8xf32> to vector<8x8xbf16>
    %cst_13 = arith.constant dense<0.000000e+00> : vector<8x8xf32>
    %36 = tpu.matmul %31, %33, %cst_13 {dimension_numbers = #tpu.dot_dimension_numbers<[1], [1], [0], [0], [0, 0, 1, 0], [], []>} : vector<8x8xbf16>, vector<8x8xbf16>, vector<8x8xf32> -> vector<8x8xf32>
    %cst_14 = arith.constant 0.353553385 : f32
    %37 = vector.broadcast %cst_14 : f32 to vector<8x8xf32>
    %38 = arith.mulf %36, %37 : vector<8x8xf32>
    %cst_15 = arith.constant dense<0xFF800000> : vector<8xf32>
    %39 = vector.multi_reduction <maximumf>, %38, %cst_15 [1] : vector<8x8xf32> to vector<8xf32>
    %40 = vector.shape_cast %39 : vector<8xf32> to vector<8x1xf32>
    %41 = vector.broadcast %40 : vector<8x1xf32> to vector<8x8xf32>
    %42 = arith.subf %38, %41 : vector<8x8xf32>
    %43 = math.exp %42 : vector<8x8xf32>
    %cst_16 = arith.constant dense<0.000000e+00> : vector<8xf32>
    %44 = vector.multi_reduction <add>, %43, %cst_16 [1] : vector<8x8xf32> to vector<8xf32>
    %45 = vector.shape_cast %44 : vector<8xf32> to vector<8x1xf32>
    %46 = vector.broadcast %45 : vector<8x1xf32> to vector<8x8xf32>
    %47 = arith.divf %43, %46 : vector<8x8xf32>
    %48 = arith.truncf %47 : vector<8x8xf32> to vector<8x8xbf16>
    %cst_17 = arith.constant dense<0.000000e+00> : vector<8x8xf32>
    %49 = tpu.matmul %48, %35, %cst_17 {dimension_numbers = #tpu.dot_dimension_numbers<[1], [0], [0], [1], [0, 0, 1, 1], [], []>} : vector<8x8xbf16>, vector<8x8xbf16>, vector<8x8xf32> -> vector<8x8xf32>
    %50 = arith.truncf %49 : vector<8x8xf32> to vector<8x8xbf16>
    %c0_18 = arith.constant 0 : index
    %c8 = arith.constant 8 : index
    %51 = vector.load %arg15[%c0_18, %c8] : memref<8x32xbf16, #tpu.memory_space<vmem>>, vector<8x8xbf16>
    tpu.vector_store %arg15[%c0_18, %c8], %50 {strides = array<i32>} : memref<8x32xbf16, #tpu.memory_space<vmem>>, vector<8x8xbf16>,
    %52 = vector.extract_strided_slice %7 {offsets = [0, 16], sizes = [8, 8], strides = [1, 1]} : vector<8x96xf32> to vector<8x8xf32>
    %53 = arith.truncf %52 : vector<8x8xf32> to vector<8x8xbf16>
    %54 = vector.extract_strided_slice %7 {offsets = [0, 48], sizes = [8, 8], strides = [1, 1]} : vector<8x96xf32> to vector<8x8xf32>
    %55 = arith.truncf %54 : vector<8x8xf32> to vector<8x8xbf16>
    %56 = vector.extract_strided_slice %7 {offsets = [0, 80], sizes = [8, 8], strides = [1, 1]} : vector<8x96xf32> to vector<8x8xf32>
    %57 = arith.truncf %56 : vector<8x8xf32> to vector<8x8xbf16>
    %cst_19 = arith.constant dense<0.000000e+00> : vector<8x8xf32>
    %58 = tpu.matmul %53, %55, %cst_19 {dimension_numbers = #tpu.dot_dimension_numbers<[1], [1], [0], [0], [0, 0, 1, 0], [], []>} : vector<8x8xbf16>, vector<8x8xbf16>, vector<8x8xf32> -> vector<8x8xf32>
    %cst_20 = arith.constant 0.353553385 : f32
    %59 = vector.broadcast %cst_20 : f32 to vector<8x8xf32>
    %60 = arith.mulf %58, %59 : vector<8x8xf32>
    %cst_21 = arith.constant dense<0xFF800000> : vector<8xf32>
    %61 = vector.multi_reduction <maximumf>, %60, %cst_21 [1] : vector<8x8xf32> to vector<8xf32>
    %62 = vector.shape_cast %61 : vector<8xf32> to vector<8x1xf32>
    %63 = vector.broadcast %62 : vector<8x1xf32> to vector<8x8xf32>
    %64 = arith.subf %60, %63 : vector<8x8xf32>
    %65 = math.exp %64 : vector<8x8xf32>
    %cst_22 = arith.constant dense<0.000000e+00> : vector<8xf32>
    %66 = vector.multi_reduction <add>, %65, %cst_22 [1] : vector<8x8xf32> to vector<8xf32>
    %67 = vector.shape_cast %66 : vector<8xf32> to vector<8x1xf32>
    %68 = vector.broadcast %67 : vector<8x1xf32> to vector<8x8xf32>
    %69 = arith.divf %65, %68 : vector<8x8xf32>
    %70 = arith.truncf %69 : vector<8x8xf32> to vector<8x8xbf16>
    %cst_23 = arith.constant dense<0.000000e+00> : vector<8x8xf32>
    %71 = tpu.matmul %70, %57, %cst_23 {dimension_numbers = #tpu.dot_dimension_numbers<[1], [0], [0], [1], [0, 0, 1, 1], [], []>} : vector<8x8xbf16>, vector<8x8xbf16>, vector<8x8xf32> -> vector<8x8xf32>
    %72 = arith.truncf %71 : vector<8x8xf32> to vector<8x8xbf16>
    %c0_24 = arith.constant 0 : index
    %c16 = arith.constant 16 : index
    %73 = vector.load %arg15[%c0_24, %c16] : memref<8x32xbf16, #tpu.memory_space<vmem>>, vector<8x8xbf16>
    tpu.vector_store %arg15[%c0_24, %c16], %72 {strides = array<i32>} : memref<8x32xbf16, #tpu.memory_space<vmem>>, vector<8x8xbf16>,
    %74 = vector.extract_strided_slice %7 {offsets = [0, 24], sizes = [8, 8], strides = [1, 1]} : vector<8x96xf32> to vector<8x8xf32>
    %75 = arith.truncf %74 : vector<8x8xf32> to vector<8x8xbf16>
    %76 = vector.extract_strided_slice %7 {offsets = [0, 56], sizes = [8, 8], strides = [1, 1]} : vector<8x96xf32> to vector<8x8xf32>
    %77 = arith.truncf %76 : vector<8x8xf32> to vector<8x8xbf16>
    %78 = vector.extract_strided_slice %7 {offsets = [0, 88], sizes = [8, 8], strides = [1, 1]} : vector<8x96xf32> to vector<8x8xf32>
    %79 = arith.truncf %78 : vector<8x8xf32> to vector<8x8xbf16>
    %cst_25 = arith.constant dense<0.000000e+00> : vector<8x8xf32>
    %80 = tpu.matmul %75, %77, %cst_25 {dimension_numbers = #tpu.dot_dimension_numbers<[1], [1], [0], [0], [0, 0, 1, 0], [], []>} : vector<8x8xbf16>, vector<8x8xbf16>, vector<8x8xf32> -> vector<8x8xf32>
    %cst_26 = arith.constant 0.353553385 : f32
    %81 = vector.broadcast %cst_26 : f32 to vector<8x8xf32>
    %82 = arith.mulf %80, %81 : vector<8x8xf32>
    %cst_27 = arith.constant dense<0xFF800000> : vector<8xf32>
    %83 = vector.multi_reduction <maximumf>, %82, %cst_27 [1] : vector<8x8xf32> to vector<8xf32>
    %84 = vector.shape_cast %83 : vector<8xf32> to vector<8x1xf32>
    %85 = vector.broadcast %84 : vector<8x1xf32> to vector<8x8xf32>
    %86 = arith.subf %82, %85 : vector<8x8xf32>
    %87 = math.exp %86 : vector<8x8xf32>
    %cst_28 = arith.constant dense<0.000000e+00> : vector<8xf32>
    %88 = vector.multi_reduction <add>, %87, %cst_28 [1] : vector<8x8xf32> to vector<8xf32>
    %89 = vector.shape_cast %88 : vector<8xf32> to vector<8x1xf32>
    %90 = vector.broadcast %89 : vector<8x1xf32> to vector<8x8xf32>
    %91 = arith.divf %87, %90 : vector<8x8xf32>
    %92 = arith.truncf %91 : vector<8x8xf32> to vector<8x8xbf16>
    %cst_29 = arith.constant dense<0.000000e+00> : vector<8x8xf32>
    %93 = tpu.matmul %92, %79, %cst_29 {dimension_numbers = #tpu.dot_dimension_numbers<[1], [0], [0], [1], [0, 0, 1, 1], [], []>} : vector<8x8xbf16>, vector<8x8xbf16>, vector<8x8xf32> -> vector<8x8xf32>
    %94 = arith.truncf %93 : vector<8x8xf32> to vector<8x8xbf16>
    %c0_30 = arith.constant 0 : index
    %c24 = arith.constant 24 : index
    %95 = vector.load %arg15[%c0_30, %c24] : memref<8x32xbf16, #tpu.memory_space<vmem>>, vector<8x8xbf16>
    tpu.vector_store %arg15[%c0_30, %c24], %94 {strides = array<i32>} : memref<8x32xbf16, #tpu.memory_space<vmem>>, vector<8x8xbf16>,
    %c0_31 = arith.constant 0 : index
    %c0_32 = arith.constant 0 : index
    %96 = vector.load %arg15[%c0_31, %c0_32] : memref<8x32xbf16, #tpu.memory_space<vmem>>, vector<8x32xbf16>
    %c0_33 = arith.constant 0 : index
    %c0_34 = arith.constant 0 : index
    %97 = vector.load %arg4[%c0_33, %c0_34] : memref<32x32xbf16, #tpu.memory_space<vmem>>, vector<32x32xbf16>
    %cst_35 = arith.constant dense<0.000000e+00> : vector<8x32xf32>
    %98 = tpu.matmul %96, %97, %cst_35 {dimension_numbers = #tpu.dot_dimension_numbers<[1], [0], [0], [1], [0, 0, 1, 1], [], []>} : vector<8x32xbf16>, vector<32x32xbf16>, vector<8x32xf32> -> vector<8x32xf32>
    %c0_36 = arith.constant 0 : index
    %c0_37 = arith.constant 0 : index
    %99 = vector.load %arg5[%c0_36, %c0_37] : memref<1x32xf32, #tpu.memory_space<vmem>>, vector<1x32xf32>
    %100 = vector.broadcast %99 : vector<1x32xf32> to vector<8x32xf32>
    %101 = arith.addf %98, %100 : vector<8x32xf32>
    %102 = arith.addf %101, %1 : vector<8x32xf32>
    %c0_38 = arith.constant 0 : index
    %c0_39 = arith.constant 0 : index
    %103 = vector.load %arg6[%c0_38, %c0_39] : memref<1x32xf32, #tpu.memory_space<vmem>>, vector<1x32xf32>
    %c0_40 = arith.constant 0 : index
    %c0_41 = arith.constant 0 : index
    %104 = vector.load %arg7[%c0_40, %c0_41] : memref<1x32xf32, #tpu.memory_space<vmem>>, vector<1x32xf32>
    %cst_42 = arith.constant dense<0.000000e+00> : vector<8xf32>
    %105 = vector.multi_reduction <add>, %102, %cst_42 [1] : vector<8x32xf32> to vector<8xf32>
    %106 = vector.shape_cast %105 : vector<8xf32> to vector<8x1xf32>
    %cst_43 = arith.constant 3.200000e+01 : f32
    %107 = vector.broadcast %cst_43 : f32 to vector<8x1xf32>
    %108 = arith.divf %106, %107 : vector<8x1xf32>
    %109 = vector.broadcast %108 : vector<8x1xf32> to vector<8x32xf32>
    %110 = arith.subf %102, %109 : vector<8x32xf32>
    %111 = arith.mulf %110, %110 : vector<8x32xf32>
    %cst_44 = arith.constant dense<0.000000e+00> : vector<8xf32>
    %112 = vector.multi_reduction <add>, %111, %cst_44 [1] : vector<8x32xf32> to vector<8xf32>
    %113 = vector.shape_cast %112 : vector<8xf32> to vector<8x1xf32>
    %cst_45 = arith.constant 3.200000e+01 : f32
    %114 = vector.broadcast %cst_45 : f32 to vector<8x1xf32>
    %115 = arith.divf %113, %114 : vector<8x1xf32>
    %cst_46 = arith.constant 9.99999974E-6 : f32
    %116 = vector.broadcast %cst_46 : f32 to vector<8x1xf32>
    %117 = arith.addf %115, %116 : vector<8x1xf32>
    %118 = math.rsqrt %117 : vector<8x1xf32>
    %119 = vector.broadcast %118 : vector<8x1xf32> to vector<8x32xf32>
    %120 = arith.mulf %110, %119 : vector<8x32xf32>
    %121 = vector.broadcast %103 : vector<1x32xf32> to vector<8x32xf32>
    %122 = arith.mulf %120, %121 : vector<8x32xf32>
    %123 = vector.broadcast %104 : vector<1x32xf32> to vector<8x32xf32>
    %124 = arith.addf %122, %123 : vector<8x32xf32>
    %125 = arith.truncf %124 : vector<8x32xf32> to vector<8x32xbf16>
    %c0_47 = arith.constant 0 : index
    %c0_48 = arith.constant 0 : index
    %126 = vector.load %arg8[%c0_47, %c0_48] : memref<32x64xbf16, #tpu.memory_space<vmem>>, vector<32x64xbf16>
    %cst_49 = arith.constant dense<0.000000e+00> : vector<8x64xf32>
    %127 = tpu.matmul %125, %126, %cst_49 {dimension_numbers = #tpu.dot_dimension_numbers<[1], [0], [0], [1], [0, 0, 1, 1], [], []>} : vector<8x32xbf16>, vector<32x64xbf16>, vector<8x64xf32> -> vector<8x64xf32>
    %c0_50 = arith.constant 0 : index
    %c0_51 = arith.constant 0 : index
    %128 = vector.load %arg9[%c0_50, %c0_51] : memref<1x64xf32, #tpu.memory_space<vmem>>, vector<1x64xf32>
    %129 = vector.broadcast %128 : vector<1x64xf32> to vector<8x64xf32>
    %130 = arith.addf %127, %129 : vector<8x64xf32>
    %cst_52 = arith.constant 0.000000e+00 : f32
    %131 = vector.broadcast %cst_52 : f32 to vector<8x64xf32>
    %132 = arith.maximumf %130, %131 : vector<8x64xf32>
    %133 = arith.truncf %132 : vector<8x64xf32> to vector<8x64xbf16>
    %c0_53 = arith.constant 0 : index
    %c0_54 = arith.constant 0 : index
    %134 = vector.load %arg10[%c0_53, %c0_54] : memref<64x32xbf16, #tpu.memory_space<vmem>>, vector<64x32xbf16>
    %cst_55 = arith.constant dense<0.000000e+00> : vector<8x32xf32>
    %135 = tpu.matmul %133, %134, %cst_55 {dimension_numbers = #tpu.dot_dimension_numbers<[1], [0], [0], [1], [0, 0, 1, 1], [], []>} : vector<8x64xbf16>, vector<64x32xbf16>, vector<8x32xf32> -> vector<8x32xf32>
    %c0_56 = arith.constant 0 : index
    %c0_57 = arith.constant 0 : index
    %136 = vector.load %arg11[%c0_56, %c0_57] : memref<1x32xf32, #tpu.memory_space<vmem>>, vector<1x32xf32>
    %137 = vector.broadcast %136 : vector<1x32xf32> to vector<8x32xf32>
    %138 = arith.addf %135, %137 : vector<8x32xf32>
    %139 = arith.addf %138, %124 : vector<8x32xf32>
    %c0_58 = arith.constant 0 : index
    %c0_59 = arith.constant 0 : index
    %140 = vector.load %arg12[%c0_58, %c0_59] : memref<1x32xf32, #tpu.memory_space<vmem>>, vector<1x32xf32>
    %c0_60 = arith.constant 0 : index
    %c0_61 = arith.constant 0 : index
    %141 = vector.load %arg13[%c0_60, %c0_61] : memref<1x32xf32, #tpu.memory_space<vmem>>, vector<1x32xf32>
    %cst_62 = arith.constant dense<0.000000e+00> : vector<8xf32>
    %142 = vector.multi_reduction <add>, %139, %cst_62 [1] : vector<8x32xf32> to vector<8xf32>
    %143 = vector.shape_cast %142 : vector<8xf32> to vector<8x1xf32>
    %cst_63 = arith.constant 3.200000e+01 : f32
    %144 = vector.broadcast %cst_63 : f32 to vector<8x1xf32>
    %145 = arith.divf %143, %144 : vector<8x1xf32>
    %146 = vector.broadcast %145 : vector<8x1xf32> to vector<8x32xf32>
    %147 = arith.subf %139, %146 : vector<8x32xf32>
    %148 = arith.mulf %147, %147 : vector<8x32xf32>
    %cst_64 = arith.constant dense<0.000000e+00> : vector<8xf32>
    %149 = vector.multi_reduction <add>, %148, %cst_64 [1] : vector<8x32xf32> to vector<8xf32>
    %150 = vector.shape_cast %149 : vector<8xf32> to vector<8x1xf32>
    %cst_65 = arith.constant 3.200000e+01 : f32
    %151 = vector.broadcast %cst_65 : f32 to vector<8x1xf32>
    %152 = arith.divf %150, %151 : vector<8x1xf32>
    %cst_66 = arith.constant 9.99999974E-6 : f32
    %153 = vector.broadcast %cst_66 : f32 to vector<8x1xf32>
    %154 = arith.addf %152, %153 : vector<8x1xf32>
    %155 = math.rsqrt %154 : vector<8x1xf32>
    %156 = vector.broadcast %155 : vector<8x1xf32> to vector<8x32xf32>
    %157 = arith.mulf %147, %156 : vector<8x32xf32>
    %158 = vector.broadcast %140 : vector<1x32xf32> to vector<8x32xf32>
    %159 = arith.mulf %157, %158 : vector<8x32xf32>
    %160 = vector.broadcast %141 : vector<1x32xf32> to vector<8x32xf32>
    %161 = arith.addf %159, %160 : vector<8x32xf32>
    %c0_67 = arith.constant 0 : index
    %c0_68 = arith.constant 0 : index
    %c0_69 = arith.constant 0 : index
    %162 = vector.load %arg14[%c0_67, %c0_68, %c0_69] : memref<1x8x32xf32, #tpu.memory_space<vmem>>, vector<1x8x32xf32>
    %163 = vector.shape_cast %162 : vector<1x8x32xf32> to vector<8x32xf32>
    %164 = vector.shape_cast %161 : vector<8x32xf32> to vector<1x8x32xf32>
    tpu.vector_store %arg14[%c0_67, %c0_68, %c0_69], %164 {strides = array<i32>} : memref<1x8x32xf32, #tpu.memory_space<vmem>>, vector<1x8x32xf32>,
    return
  }
  func.func @transform_0(%arg0: i32) -> (i32, i32, i32) {
    %c0_i32 = arith.constant 0 : i32
    %c0_i32_0 = arith.constant 0 : i32
    %c0_i32_1 = arith.constant 0 : i32
    return %arg0, %c0_i32, %c0_i32_0 : i32, i32, i32
  }
  func.func @transform_1(%arg0: i32) -> (i32, i32) {
    %c0_i32 = arith.constant 0 : i32
    %c0_i32_0 = arith.constant 0 : i32
    %c0_i32_1 = arith.constant 0 : i32
    return %c0_i32, %c0_i32_0 : i32, i32
  }
  func.func @transform_2(%arg0: i32) -> (i32, i32) {
    %c0_i32 = arith.constant 0 : i32
    %c0_i32_0 = arith.constant 0 : i32
    %c0_i32_1 = arith.constant 0 : i32
    return %c0_i32, %c0_i32_0 : i32, i32
  }
  func.func @transform_3(%arg0: i32) -> (i32, i32) {
    %c0_i32 = arith.constant 0 : i32
    %c0_i32_0 = arith.constant 0 : i32
    %c0_i32_1 = arith.constant 0 : i32
    return %c0_i32, %c0_i32_0 : i32, i32
  }
  func.func @transform_4(%arg0: i32) -> (i32, i32) {
    %c0_i32 = arith.constant 0 : i32
    %c0_i32_0 = arith.constant 0 : i32
    %c0_i32_1 = arith.constant 0 : i32
    return %c0_i32, %c0_i32_0 : i32, i32
  }
  func.func @transform_5(%arg0: i32) -> (i32, i32) {
    %c0_i32 = arith.constant 0 : i32
    %c0_i32_0 = arith.constant 0 : i32
    %c0_i32_1 = arith.constant 0 : i32
    return %c0_i32, %c0_i32_0 : i32, i32
  }
  func.func @transform_6(%arg0: i32) -> (i32, i32) {
    %c0_i32 = arith.constant 0 : i32
    %c0_i32_0 = arith.constant 0 : i32
    %c0_i32_1 = arith.constant 0 : i32
    return %c0_i32, %c0_i32_0 : i32, i32
  }
  func.func @transform_7(%arg0: i32) -> (i32, i32) {
    %c0_i32 = arith.constant 0 : i32
    %c0_i32_0 = arith.constant 0 : i32
    %c0_i32_1 = arith.constant 0 : i32
    return %c0_i32, %c0_i32_0 : i32, i32
  }
  func.func @transform_8(%arg0: i32) -> (i32, i32) {
    %c0_i32 = arith.constant 0 : i32
    %c0_i32_0 = arith.constant 0 : i32
    %c0_i32_1 = arith.constant 0 : i32
    return %c0_i32, %c0_i32_0 : i32, i32
  }
  func.func @transform_9(%arg0: i32) -> (i32, i32) {
    %c0_i32 = arith.constant 0 : i32
    %c0_i32_0 = arith.constant 0 : i32
    %c0_i32_1 = arith.constant 0 : i32
    return %c0_i32, %c0_i32_0 : i32, i32
  }
  func.func @transform_10(%arg0: i32) -> (i32, i32) {
    %c0_i32 = arith.constant 0 : i32
    %c0_i32_0 = arith.constant 0 : i32
    %c0_i32_1 = arith.constant 0 : i32
    return %c0_i32, %c0_i32_0 : i32, i32
  }
  func.func @transform_11(%arg0: i32) -> (i32, i32) {
    %c0_i32 = arith.constant 0 : i32
    %c0_i32_0 = arith.constant 0 : i32
    %c0_i32_1 = arith.constant 0 : i32
    return %c0_i32, %c0_i32_0 : i32, i32
  }
  func.func @transform_12(%arg0: i32) -> (i32, i32) {
    %c0_i32 = arith.constant 0 : i32
    %c0_i32_0 = arith.constant 0 : i32
    %c0_i32_1 = arith.constant 0 : i32
    return %c0_i32, %c0_i32_0 : i32, i32
  }
  func.func @transform_13(%arg0: i32) -> (i32, i32, i32) {
    %c0_i32 = arith.constant 0 : i32
    %c0_i32_0 = arith.constant 0 : i32
    %c0_i32_1 = arith.constant 0 : i32
    return %arg0, %c0_i32, %c0_i32_0 : i32, i32, i32
  }
}

</mosaic_0001>

<llo_original>
// kernel: rhythm_discriminator_forward.5
$region0: #{rhythm_discriminator_forward.5}
  #allocation0 [shape = 'u32[]', space=smem, size = 0x4, offset = 0x4, fixed_abs, tag = 'smem constant byte address 0x4 - core index']
  #allocation1 [shape = 'u32[72,128]{1,0:T(1,128)}', space=vmem, size = 0x9000, scoped, tag = 'internal scratch']
  %s0 = inlined_call_operand.vmem [shape: f32[2,32], index: 0, kind: input, shape index: {}]
  %s1 = inlined_call_operand.vmem [shape: f32[1,32], index: 1, kind: input, shape index: {}]
  %s2 = inlined_call_operand.vmem [shape: f32[1,32], index: 2, kind: input, shape index: {}]
  %s3 = inlined_call_operand.vmem [shape: bf16[32,128], index: 3, kind: input, shape index: {}]
  %s4 = inlined_call_operand.vmem [shape: f32[1,128], index: 4, kind: input, shape index: {}]
  %s5 = inlined_call_operand.vmem [shape: bf16[128,32], index: 5, kind: input, shape index: {}]
  %s6 = inlined_call_operand.vmem [shape: f32[1,32], index: 6, kind: input, shape index: {}]
  %s7 = inlined_call_operand.vmem [shape: bf16[32,8], index: 7, kind: input, shape index: {}]
  %s8 = inlined_call_operand.vmem [shape: f32[1,8], index: 8, kind: input, shape index: {}]
  %s9 = inlined_call_operand.vmem [shape: bf16[8,2], index: 9, kind: input, shape index: {}]
  %s10 = inlined_call_operand.vmem [shape: f32[1,2], index: 10, kind: input, shape index: {}]
  %s11 = inlined_call_operand.hbm [shape: f32[2,2], index: 11, kind: output, shape index: {}]
  %s12 = sld [smem:[#allocation0]]
  $region54: #{rhythm_discriminator_forward.5} parent=0
    _
  %s14 = ssub.s32 1, %s12
  %s15 = scalar_select 0, %s14, %s12
  $region1: #{rhythm_discriminator_forward.5} parent=0
    #allocation2 [shape = 'u8[1024]{0}', space=vmem, size = 0x400, scoped, tag = 'output window, operand 0, single buffered']
    #allocation3 [shape = 's32[1]{0}', space=sflag, size = 0x4, scoped, tag = 'scoped memory for rhythm_discriminator_forward.5']
    %16 = vsyncpa [#allocation3], 0
    // Predicated region
    $region2: #{rhythm_discriminator_forward.5} parent=1 // pred_check
      _
    $region3: #{rhythm_discriminator_forward.5} parent=1 // pred_check_branch
      %18 = sbr.rel (0) target = $region5
    $region4: #{rhythm_discriminator_forward.5} parent=1 // pred_region
      _
    $region5: #{rhythm_discriminator_forward.5} parent=1 // pred_fallthru
      _
    // Predicated region
    $region6: #{rhythm_discriminator_forward.5} parent=1 // pred_check
      _
    $region7: #{rhythm_discriminator_forward.5} parent=1 // pred_check_branch
      %20 = sbr.rel (0) target = $region9
    $region8: #{rhythm_discriminator_forward.5} parent=1 // pred_region
      _
    $region9: #{rhythm_discriminator_forward.5} parent=1 // pred_fallthru
      _
    // Predicated region
    $region10: #{rhythm_discriminator_forward.5} parent=1 // pred_check
      _
    $region11: #{rhythm_discriminator_forward.5} parent=1 // pred_check_branch
      %22 = sbr.rel (0) target = $region13
    $region12: #{rhythm_discriminator_forward.5} parent=1 // pred_region
      _
    $region13: #{rhythm_discriminator_forward.5} parent=1 // pred_fallthru
      _
    // Predicated region
    $region14: #{rhythm_discriminator_forward.5} parent=1 // pred_check
      _
    $region15: #{rhythm_discriminator_forward.5} parent=1 // pred_check_branch
      %24 = sbr.rel (0) target = $region17
    $region16: #{rhythm_discriminator_forward.5} parent=1 // pred_region
      _
    $region17: #{rhythm_discriminator_forward.5} parent=1 // pred_fallthru
      _
    // Predicated region
    $region18: #{rhythm_discriminator_forward.5} parent=1 // pred_check
      _
    $region19: #{rhythm_discriminator_forward.5} parent=1 // pred_check_branch
      %26 = sbr.rel (0) target = $region21
    $region20: #{rhythm_discriminator_forward.5} parent=1 // pred_region
      _
    $region21: #{rhythm_discriminator_forward.5} parent=1 // pred_fallthru
      _
    // Predicated region
    $region22: #{rhythm_discriminator_forward.5} parent=1 // pred_check
      _
    $region23: #{rhythm_discriminator_forward.5} parent=1 // pred_check_branch
      %28 = sbr.rel (0) target = $region25
    $region24: #{rhythm_discriminator_forward.5} parent=1 // pred_region
      _
    $region25: #{rhythm_discriminator_forward.5} parent=1 // pred_fallthru
      _
    // Predicated region
    $region26: #{rhythm_discriminator_forward.5} parent=1 // pred_check
      _
    $region27: #{rhythm_discriminator_forward.5} parent=1 // pred_check_branch
      %30 = sbr.rel (0) target = $region29
    $region28: #{rhythm_discriminator_forward.5} parent=1 // pred_region
      _
    $region29: #{rhythm_discriminator_forward.5} parent=1 // pred_fallthru
      _
    // Predicated region
    $region30: #{rhythm_discriminator_forward.5} parent=1 // pred_check
      _
    $region31: #{rhythm_discriminator_forward.5} parent=1 // pred_check_branch
      %32 = sbr.rel (0) target = $region33
    $region32: #{rhythm_discriminator_forward.5} parent=1 // pred_region
      _
    $region33: #{rhythm_discriminator_forward.5} parent=1 // pred_fallthru
      _
    // Predicated region
    $region34: #{rhythm_discriminator_forward.5} parent=1 // pred_check
      _
    $region35: #{rhythm_discriminator_forward.5} parent=1 // pred_check_branch
      %34 = sbr.rel (0) target = $region37
    $region36: #{rhythm_discriminator_forward.5} parent=1 // pred_region
      _
    $region37: #{rhythm_discriminator_forward.5} parent=1 // pred_fallthru
      _
    // Predicated region
    $region38: #{rhythm_discriminator_forward.5} parent=1 // pred_check
      _
    $region39: #{rhythm_discriminator_forward.5} parent=1 // pred_check_branch
      %36 = sbr.rel (0) target = $region41
    $region40: #{rhythm_discriminator_forward.5} parent=1 // pred_region
      _
    $region41: #{rhythm_discriminator_forward.5} parent=1 // pred_fallthru
      _
    // Predicated region
    $region42: #{rhythm_discriminator_forward.5} parent=1 // pred_check
      _
    $region43: #{rhythm_discriminator_forward.5} parent=1 // pred_check_branch
      %38 = sbr.rel (0) target = $region45
    $region44: #{rhythm_discriminator_forward.5} parent=1 // pred_region
      _
    $region45: #{rhythm_discriminator_forward.5} parent=1 // pred_fallthru
      _
    %v40 = vld [vmem:[%s0] sm:$0x3]
    %v41 = vld [vmem:[%s1] sm:$0x1]
    %v42 = vld [vmem:[%s2] sm:$0x1]
    %vm43 = vcmask 254976
    %v44 = vsel %vm43, %v40, 0.0
    %45 = vadd.xlane.f32.xlu0 %v44
    %v46 = vpop.xlane.xlu0 %45
    %v47 = vrcp.pop 32.0
    %v48 = vmul.f32 32.0, %v47
    %v49 = vsub.f32 1.0, %v48
    %v50 = vmul.f32 %v47, %v49
    %v51 = vadd.f32 %v47, %v50
    %vm52 = vweird.f32 %v47
    %v53 = vsel %vm52, %v47, %v51
    %v54 = vmul.f32 %v46, %v53
    %v55 = vsub.f32 %v40, %v54
    %v56 = vmul.f32 %v55, %v55
    %v57 = vsel %vm43, %v56, 0.0
    %58 = vadd.xlane.f32.xlu0 %v57
    %v59 = vpop.xlane.xlu0 %58
    %v60 = vmul.f32 %v59, %v53
    %v61 = vadd.f32 %v60, 1e-05
    %v62 = vrsqrt.pop %v61
    %v63 = vmul.f32 %v62, %v61
    %v64 = vmul.f32 %v63, %v62
    %v65 = vmul.f32 0.5, %v64
    %v66 = vsub.f32 1.5, %v65
    %v67 = vmul.f32 %v62, %v66
    %vm68 = vweird.f32 %v61
    %vm69 = vweird.f32 %v62
    %vm70 = vmor %vm68, %vm69
    %v71 = vsel %vm70, %v62, %v67
    %v72 = vmul.f32 %v55, %v71
    %v74 = vperm.slane %v41, 0
    %v76 = vmul.f32 %v72, %v74
    %v78 = vperm.slane %v42, 0
    %v80 = vadd.f32 %v76, %v78
    %v81 = vpack.c.bf16 %v80, %v80
    %v82 = vld [vmem:[%s3] sm:$0xf]
    %v83 = vld [vmem:[%s3 + $0x4] sm:$0xf]
    %v84 = vld [vmem:[%s3 + $0x8] sm:$0xf]
    %v85 = vld [vmem:[%s3 + $0xc] sm:$0xf]
    %v86 = vld [vmem:[%s4] sm:$0x1]
    %v88 = vperm.slane %v86, 0
    %v94 = vunpack.c.l.b16 %v82
    %v95 = vunpack.c.l.b16 %v83
    %v96 = vunpack.c.l.b16 %v84
    %v97 = vunpack.c.l.b16 %v85
    %v98 = vpack.c.b16 %v95, %v94
    %v99 = vpack.c.b16 %v97, %v96
    %vm102 = vcmask 261120
    %v104 = vsel %vm102, %v81, 0
    %106 = vmatpush.bf16.msra.mxu0 0
    %107 = vmatpush.bf16.msra.mxu0 0
    %108 = vmatpush.bf16.msra.mxu0 0
    %109 = vmatpush.bf16.msra.mxu0 0
    %110 = vmatpush.bf16.msra.mxu0 0
    %111 = vmatpush.bf16.msra.mxu0 0
    %112 = vmatpush.bf16.msra.mxu0 %v99
    %113 = vmatpush.bf16.msra.mxu0 %v98
    %114 = vmatmul.bf16.gmra.mxu0 %v104
    %v115 = vpop.f32.mrf.mxu0
    %v116 = vadd.f32 %v88, %v115
    %v117 = vpop.f32.mrf.mxu0
    %118 = vdwg.mxu0
    %v119 = vmax.f32 %v116, 0.0
    %v120 = vpack.c.bf16 %v119, %v119
    %v121 = vld [vmem:[%s5] sm:$0xf]
    %v122 = vld [vmem:[%s5 + $0x4] sm:$0xf]
    %v123 = vld [vmem:[%s5 + $0x8] sm:$0xf]
    %v124 = vld [vmem:[%s5 + $0xc] sm:$0xf]
    %v125 = vld [vmem:[%s5 + $0x10] sm:$0xf]
    %v126 = vld [vmem:[%s5 + $0x14] sm:$0xf]
    %v127 = vld [vmem:[%s5 + $0x18] sm:$0xf]
    %v128 = vld [vmem:[%s5 + $0x1c] sm:$0xf]
    %v129 = vld [vmem:[%s5 + $0x20] sm:$0xf]
    %v130 = vld [vmem:[%s5 + $0x24] sm:$0xf]
    %v131 = vld [vmem:[%s5 + $0x28] sm:$0xf]
    %v132 = vld [vmem:[%s5 + $0x2c] sm:$0xf]
    %v133 = vld [vmem:[%s5 + $0x30] sm:$0xf]
    %v134 = vld [vmem:[%s5 + $0x34] sm:$0xf]
    %v135 = vld [vmem:[%s5 + $0x38] sm:$0xf]
    %v136 = vld [vmem:[%s5 + $0x3c] sm:$0xf]
    %v137 = vld [vmem:[%s6] sm:$0x1]
    %v139 = vperm.slane %v137, 0
    %v157 = vunpack.c.l.b16 %v121
    %v158 = vunpack.c.l.b16 %v122
    %v159 = vunpack.c.l.b16 %v123
    %v160 = vunpack.c.l.b16 %v124
    %v161 = vunpack.c.l.b16 %v125
    %v162 = vunpack.c.l.b16 %v126
    %v163 = vunpack.c.l.b16 %v127
    %v164 = vunpack.c.l.b16 %v128
    %v165 = vunpack.c.l.b16 %v129
    %v166 = vunpack.c.l.b16 %v130
    %v167 = vunpack.c.l.b16 %v131
    %v168 = vunpack.c.l.b16 %v132
    %v169 = vunpack.c.l.b16 %v133
    %v170 = vunpack.c.l.b16 %v134
    %v171 = vunpack.c.l.b16 %v135
    %v172 = vunpack.c.l.b16 %v136
    %v173 = vpack.c.b16 %v158, %v157
    %v174 = vpack.c.b16 %v160, %v159
    %v175 = vpack.c.b16 %v162, %v161
    %v176 = vpack.c.b16 %v164, %v163
    %v177 = vpack.c.b16 %v166, %v165
    %v178 = vpack.c.b16 %v168, %v167
    %v179 = vpack.c.b16 %v170, %v169
    %v180 = vpack.c.b16 %v172, %v171
    %189 = vmatpush.bf16.msra.mxu0 %v180
    %190 = vmatpush.bf16.msra.mxu0 %v179
    %191 = vmatpush.bf16.msra.mxu0 %v178
    %192 = vmatpush.bf16.msra.mxu0 %v177
    %193 = vmatpush.bf16.msra.mxu0 %v176
    %194 = vmatpush.bf16.msra.mxu0 %v175
    %195 = vmatpush.bf16.msra.mxu0 %v174
    %196 = vmatpush.bf16.msra.mxu0 %v173
    %197 = vmatmul.bf16.gmra.mxu0 %v120
    %v198 = vpop.f32.mrf.mxu0
    %v199 = vadd.f32 %v139, %v198
    %v200 = vpop.f32.mrf.mxu0
    %201 = vdwg.mxu0
    %v202 = vmax.f32 %v199, 0.0
    %v203 = vpack.c.bf16 %v202, %v202
    %v204 = vld [vmem:[%s7] sm:$0xf]
    %v205 = vld [vmem:[%s7 + $0x4] sm:$0xf]
    %v206 = vld [vmem:[%s7 + $0x8] sm:$0xf]
    %v207 = vld [vmem:[%s7 + $0xc] sm:$0xf]
    %v208 = vld [vmem:[%s8] sm:$0x1]
    %v210 = vperm.slane %v208, 0
    %v216 = vunpack.c.l.b16 %v204
    %v217 = vunpack.c.l.b16 %v205
    %v218 = vunpack.c.l.b16 %v206
    %v219 = vunpack.c.l.b16 %v207
    %v220 = vpack.c.b16 %v217, %v216
    %v221 = vpack.c.b16 %v219, %v218
    %v225 = vsel %vm102, %v203, 0
    %227 = vmatpush.bf16.msra.mxu0 0
    %228 = vmatpush.bf16.msra.mxu0 0
    %229 = vmatpush.bf16.msra.mxu0 0
    %230 = vmatpush.bf16.msra.mxu0 0
    %231 = vmatpush.bf16.msra.mxu0 0
    %232 = vmatpush.bf16.msra.mxu0 0
    %233 = vmatpush.bf16.msra.mxu0 %v221
    %234 = vmatpush.bf16.msra.mxu0 %v220
    %235 = vmatmul.bf16.gmra.mxu0 %v225
    %v236 = vpop.f32.mrf.mxu0
    %v237 = vadd.f32 %v210, %v236
    %v238 = vpop.f32.mrf.mxu0
    %239 = vdwg.mxu0
    %v240 = vmax.f32 %v237, 0.0
    %v241 = vpack.c.bf16 %v240, %v240
    %v242 = vld [vmem:[%s9] sm:$0xf]
    %v243 = vld [vmem:[%s10] sm:$0x1]
    %v245 = vperm.slane %v243, 0
    %vm247 = vcmask 64512
    %v249 = vsel %vm247, %v241, 0
    %vm251 = vcmask 1043456
    %v253 = vsel %vm251, %v242, 0
    %255 = vmatpush.bf16.msra.mxu0 0
    %256 = vmatpush.bf16.msra.mxu0 0
    %257 = vmatpush.bf16.msra.mxu0 0
    %258 = vmatpush.bf16.msra.mxu0 0
    %259 = vmatpush.bf16.msra.mxu0 0
    %260 = vmatpush.bf16.msra.mxu0 0
    %261 = vmatpush.bf16.msra.mxu0 0
    %262 = vmatpush.bf16.msra.mxu0 %v253
    %263 = vmatmul.bf16.gmra.mxu0 %v249
    %v264 = vpop.f32.mrf.mxu0
    %v265 = vadd.f32 %v245, %v264
    %v266 = vpop.f32.mrf.mxu0
    %267 = vdwg.mxu0
    %vm268 = vcmask 9216
    %269 = vst.msk [vmem:[#allocation2] sm:$0x3] %vm268, %v265
    // Predicated region
    $region46: #{rhythm_discriminator_forward.5} parent=1 // pred_check
      _
    $region47: #{rhythm_discriminator_forward.5} parent=1 // pred_check_branch
      %271 = sbr.rel (0) target = $region49
    $region48: #{rhythm_discriminator_forward.5} parent=1 // pred_region
      %273 = vsyncadd [#allocation3], 0
      %s275 = sshll.u32 [#allocation2], 4
      %s276 = int_to_ptr.vmem [resolvable:$true] %s275
      %s277 = sshll.u32 %s11, 4
      %s278 = int_to_ptr.hbm [resolvable:$true] %s277
      %280 = dma.vmem_to_hbm [thread:$0]  %s276, 32, %s278, [#allocation3]
    $region49: #{rhythm_discriminator_forward.5} parent=1 // pred_fallthru
      _
    // Predicated region
    $region50: #{rhythm_discriminator_forward.5} parent=1 // pred_check
      _
    $region51: #{rhythm_discriminator_forward.5} parent=1 // pred_check_branch
      %282 = sbr.rel (0) target = $region53
    $region52: #{rhythm_discriminator_forward.5} parent=1 // pred_region
      %284 = dma.done [#allocation3], 32
    $region53: #{rhythm_discriminator_forward.5} parent=1 // pred_fallthru
      _
    %285 = vsyncpa [#allocation3], 1

// kernel: rhythm_discriminator_forward.3
$region0: #{rhythm_discriminator_forward.3}
  #allocation0 [shape = 'u32[]', space=smem, size = 0x4, offset = 0x4, fixed_abs, tag = 'smem constant byte address 0x4 - core index']
  #allocation1 [shape = 'u32[72,128]{1,0:T(1,128)}', space=vmem, size = 0x9000, scoped, tag = 'internal scratch']
  #allocation2 [shape = 'bf16[8,32]{1,0:T(8,128)(2,1)}', space=vmem, size = 0x800, scoped, tag = 'scratch operand']
  %s0 = inlined_call_operand.vmem [shape: f32[2,8,32], index: 0, kind: input, shape index: {}]
  %s1 = inlined_call_operand.vmem [shape: bf16[32,96], index: 1, kind: input, shape index: {}]
  %s2 = inlined_call_operand.vmem [shape: f32[1,96], index: 2, kind: input, shape index: {}]
  %s3 = inlined_call_operand.vmem [shape: bf16[32,32], index: 3, kind: input, shape index: {}]
  %s4 = inlined_call_operand.vmem [shape: f32[1,32], index: 4, kind: input, shape index: {}]
  %s5 = inlined_call_operand.vmem [shape: f32[1,32], index: 5, kind: input, shape index: {}]
  %s6 = inlined_call_operand.vmem [shape: f32[1,32], index: 6, kind: input, shape index: {}]
  %s7 = inlined_call_operand.vmem [shape: bf16[32,64], index: 7, kind: input, shape index: {}]
  %s8 = inlined_call_operand.vmem [shape: f32[1,64], index: 8, kind: input, shape index: {}]
  %s9 = inlined_call_operand.vmem [shape: bf16[64,32], index: 9, kind: input, shape index: {}]
  %s10 = inlined_call_operand.vmem [shape: f32[1,32], index: 10, kind: input, shape index: {}]
  %s11 = inlined_call_operand.vmem [shape: f32[1,32], index: 11, kind: input, shape index: {}]
  %s12 = inlined_call_operand.vmem [shape: f32[1,32], index: 12, kind: input, shape index: {}]
  %s13 = inlined_call_operand.vmem [shape: f32[2,8,32], index: 13, kind: output, shape index: {}]
  %s14 = sld [smem:[#allocation0]]
  $region85: #{rhythm_discriminator_forward.3} parent=0
    _
  %s16 = ssub.s32 1, %s14
  %s17 = scalar_select 0, %s16, %s14
  loop: start=0, step=1, limit=4
  $region2: #{rhythm_discriminator_forward.3} parent=0 // loop_pre_header
    _
  $region3: #{rhythm_discriminator_forward.3} parent=0 // loop_header
    %s19 = sphi 0, %s23
    %p20 = scmp.ge.s32.totalorder %s19, 4
    %s29 = sphi 0, %s31
    %s32 = sphi 0, %s29
    %s33 = sphi 0, %s32
    %s49 = sphi 0, %s33
    %s53 = sphi 0, %s53
    %s55 = sphi 0, %s53
    %s56 = sphi 0, %s55
    %s70 = sphi 0, %s56
    %s74 = sphi 0, %s74
    %s76 = sphi 0, %s74
    %s77 = sphi 0, %s76
    %s91 = sphi 0, %s77
    %s95 = sphi 0, %s95
    %s97 = sphi 0, %s95
    %s98 = sphi 0, %s97
    %s112 = sphi 0, %s98
    %s116 = sphi 0, %s116
    %s118 = sphi 0, %s116
    %s119 = sphi 0, %s118
    %s133 = sphi 0, %s119
    %s137 = sphi 0, %s137
    %s139 = sphi 0, %s137
    %s140 = sphi 0, %s139
    %s154 = sphi 0, %s140
    %s158 = sphi 0, %s158
    %s160 = sphi 0, %s158
    %s161 = sphi 0, %s160
    %s175 = sphi 0, %s161
    %s179 = sphi 0, %s179
    %s181 = sphi 0, %s179
    %s182 = sphi 0, %s181
    %s196 = sphi 0, %s182
    %s200 = sphi 0, %s200
    %s202 = sphi 0, %s200
    %s203 = sphi 0, %s202
    %s217 = sphi 0, %s203
    %s221 = sphi 0, %s221
    %s223 = sphi 0, %s221
    %s224 = sphi 0, %s223
    %s238 = sphi 0, %s224
    %s242 = sphi 0, %s242
    %s244 = sphi 0, %s242
    %s245 = sphi 0, %s244
    %s259 = sphi 0, %s245
    %s263 = sphi 0, %s263
    %s265 = sphi 0, %s263
    %s266 = sphi 0, %s265
    %s280 = sphi 0, %s266
    %s284 = sphi 0, %s284
    %s286 = sphi 0, %s284
    %s287 = sphi 0, %s286
    %s301 = sphi 0, %s287
    %s307 = sphi 0, %s309
    %s310 = sphi 0, %s307
    %s311 = sphi 0, %s310
    %s327 = sphi 0, %s311
  $region4: #{rhythm_discriminator_forward.3} parent=0 // loop_header_branch
    %22 = sbr.rel (%p20) target = $region8
  $region5: #{rhythm_discriminator_forward.3} parent=0 // loop_body
    %s24 = ssub.s32 %s19, 1
    %s25 = ssub.s32 %s19, 2
    %s26 = sadd.s32 %s19, 1
    %s27 = ssub.s32 %s19, %s26
    %p28 = scmp.eq.s32.totalorder %s27, 0
    %s30 = sadd.s32 %s29, 1
    %s31 = scalar_select %p28, %s29, %s30
    %p34 = pneg %p28
    %p35 = scmp.eq.s32.totalorder %s19, 1
    %p36 = por %p34, %p35
    %p37 = scmp.ne.s32.totalorder %s29, %s32
    %p38 = scmp.eq.s32.totalorder %s19, 0
    %p39 = por %p37, %p38
    %p40 = scmp.ne.s32.totalorder %s29, %s32
    %p41 = scmp.eq.s32.totalorder %s24, 1
    %p42 = por %p40, %p41
    %p43 = scmp.ne.s32.totalorder %s32, %s33
    %p44 = scmp.eq.s32.totalorder %s24, 0
    %p45 = por %p43, %p44
    %p46 = scmp.ne.s32.totalorder %s32, %s33
    %p47 = scmp.eq.s32.totalorder %s25, 1
    %p48 = por %p46, %p47
    %p50 = scmp.ne.s32.totalorder %s33, %s49
    %p51 = scmp.eq.s32.totalorder %s25, 0
    %p52 = por %p50, %p51
    %s54 = sadd.s32 %s53, 1
    %p57 = scmp.eq.s32.totalorder %s19, 1
    %p58 = scmp.ne.s32.totalorder %s53, %s55
    %p59 = scmp.eq.s32.totalorder %s19, 0
    %p60 = por %p58, %p59
    %p61 = scmp.ne.s32.totalorder %s53, %s55
    %p62 = scmp.eq.s32.totalorder %s24, 1
    %p63 = por %p61, %p62
    %p64 = scmp.ne.s32.totalorder %s55, %s56
    %p65 = scmp.eq.s32.totalorder %s24, 0
    %p66 = por %p64, %p65
    %p67 = scmp.ne.s32.totalorder %s55, %s56
    %p68 = scmp.eq.s32.totalorder %s25, 1
    %p69 = por %p67, %p68
    %p71 = scmp.ne.s32.totalorder %s56, %s70
    %p72 = scmp.eq.s32.totalorder %s25, 0
    %p73 = por %p71, %p72
    %s75 = sadd.s32 %s74, 1
    %p78 = scmp.eq.s32.totalorder %s19, 1
    %p79 = scmp.ne.s32.totalorder %s74, %s76
    %p80 = scmp.eq.s32.totalorder %s19, 0
    %p81 = por %p79, %p80
    %p82 = scmp.ne.s32.totalorder %s74, %s76
    %p83 = scmp.eq.s32.totalorder %s24, 1
    %p84 = por %p82, %p83
    %p85 = scmp.ne.s32.totalorder %s76, %s77
    %p86 = scmp.eq.s32.totalorder %s24, 0
    %p87 = por %p85, %p86
    %p88 = scmp.ne.s32.totalorder %s76, %s77
    %p89 = scmp.eq.s32.totalorder %s25, 1
    %p90 = por %p88, %p89
    %p92 = scmp.ne.s32.totalorder %s77, %s91
    %p93 = scmp.eq.s32.totalorder %s25, 0
    %p94 = por %p92, %p93
    %s96 = sadd.s32 %s95, 1
    %p99 = scmp.eq.s32.totalorder %s19, 1
    %p100 = scmp.ne.s32.totalorder %s95, %s97
    %p101 = scmp.eq.s32.totalorder %s19, 0
    %p102 = por %p100, %p101
    %p103 = scmp.ne.s32.totalorder %s95, %s97
    %p104 = scmp.eq.s32.totalorder %s24, 1
    %p105 = por %p103, %p104
    %p106 = scmp.ne.s32.totalorder %s97, %s98
    %p107 = scmp.eq.s32.totalorder %s24, 0
    %p108 = por %p106, %p107
    %p109 = scmp.ne.s32.totalorder %s97, %s98
    %p110 = scmp.eq.s32.totalorder %s25, 1
    %p111 = por %p109, %p110
    %p113 = scmp.ne.s32.totalorder %s98, %s112
    %p114 = scmp.eq.s32.totalorder %s25, 0
    %p115 = por %p113, %p114
    %s117 = sadd.s32 %s116, 1
    %p120 = scmp.eq.s32.totalorder %s19, 1
    %p121 = scmp.ne.s32.totalorder %s116, %s118
    %p122 = scmp.eq.s32.totalorder %s19, 0
    %p123 = por %p121, %p122
    %p124 = scmp.ne.s32.totalorder %s116, %s118
    %p125 = scmp.eq.s32.totalorder %s24, 1
    %p126 = por %p124, %p125
    %p127 = scmp.ne.s32.totalorder %s118, %s119
    %p128 = scmp.eq.s32.totalorder %s24, 0
    %p129 = por %p127, %p128
    %p130 = scmp.ne.s32.totalorder %s118, %s119
    %p131 = scmp.eq.s32.totalorder %s25, 1
    %p132 = por %p130, %p131
    %p134 = scmp.ne.s32.totalorder %s119, %s133
    %p135 = scmp.eq.s32.totalorder %s25, 0
    %p136 = por %p134, %p135
    %s138 = sadd.s32 %s137, 1
    %p141 = scmp.eq.s32.totalorder %s19, 1
    %p142 = scmp.ne.s32.totalorder %s137, %s139
    %p143 = scmp.eq.s32.totalorder %s19, 0
    %p144 = por %p142, %p143
    %p145 = scmp.ne.s32.totalorder %s137, %s139
    %p146 = scmp.eq.s32.totalorder %s24, 1
    %p147 = por %p145, %p146
    %p148 = scmp.ne.s32.totalorder %s139, %s140
    %p149 = scmp.eq.s32.totalorder %s24, 0
    %p150 = por %p148, %p149
    %p151 = scmp.ne.s32.totalorder %s139, %s140
    %p152 = scmp.eq.s32.totalorder %s25, 1
    %p153 = por %p151, %p152
    %p155 = scmp.ne.s32.totalorder %s140, %s154
    %p156 = scmp.eq.s32.totalorder %s25, 0
    %p157 = por %p155, %p156
    %s159 = sadd.s32 %s158, 1
    %p162 = scmp.eq.s32.totalorder %s19, 1
    %p163 = scmp.ne.s32.totalorder %s158, %s160
    %p164 = scmp.eq.s32.totalorder %s19, 0
    %p165 = por %p163, %p164
    %p166 = scmp.ne.s32.totalorder %s158, %s160
    %p167 = scmp.eq.s32.totalorder %s24, 1
    %p168 = por %p166, %p167
    %p169 = scmp.ne.s32.totalorder %s160, %s161
    %p170 = scmp.eq.s32.totalorder %s24, 0
    %p171 = por %p169, %p170
    %p172 = scmp.ne.s32.totalorder %s160, %s161
    %p173 = scmp.eq.s32.totalorder %s25, 1
    %p174 = por %p172, %p173
    %p176 = scmp.ne.s32.totalorder %s161, %s175
    %p177 = scmp.eq.s32.totalorder %s25, 0
    %p178 = por %p176, %p177
    %s180 = sadd.s32 %s179, 1
    %p183 = scmp.eq.s32.totalorder %s19, 1
    %p184 = scmp.ne.s32.totalorder %s179, %s181
    %p185 = scmp.eq.s32.totalorder %s19, 0
    %p186 = por %p184, %p185
    %p187 = scmp.ne.s32.totalorder %s179, %s181
    %p188 = scmp.eq.s32.totalorder %s24, 1
    %p189 = por %p187, %p188
    %p190 = scmp.ne.s32.totalorder %s181, %s182
    %p191 = scmp.eq.s32.totalorder %s24, 0
    %p192 = por %p190, %p191
    %p193 = scmp.ne.s32.totalorder %s181, %s182
    %p194 = scmp.eq.s32.totalorder %s25, 1
    %p195 = por %p193, %p194
    %p197 = scmp.ne.s32.totalorder %s182, %s196
    %p198 = scmp.eq.s32.totalorder %s25, 0
    %p199 = por %p197, %p198
    %s201 = sadd.s32 %s200, 1
    %p204 = scmp.eq.s32.totalorder %s19, 1
    %p205 = scmp.ne.s32.totalorder %s200, %s202
    %p206 = scmp.eq.s32.totalorder %s19, 0
    %p207 = por %p205, %p206
    %p208 = scmp.ne.s32.totalorder %s200, %s202
    %p209 = scmp.eq.s32.totalorder %s24, 1
    %p210 = por %p208, %p209
    %p211 = scmp.ne.s32.totalorder %s202, %s203
    %p212 = scmp.eq.s32.totalorder %s24, 0
    %p213 = por %p211, %p212
    %p214 = scmp.ne.s32.totalorder %s202, %s203
    %p215 = scmp.eq.s32.totalorder %s25, 1
    %p216 = por %p214, %p215
    %p218 = scmp.ne.s32.totalorder %s203, %s217
    %p219 = scmp.eq.s32.totalorder %s25, 0
    %p220 = por %p218, %p219
    %s222 = sadd.s32 %s221, 1
    %p225 = scmp.eq.s32.totalorder %s19, 1
    %p226 = scmp.ne.s32.totalorder %s221, %s223
    %p227 = scmp.eq.s32.totalorder %s19, 0
    %p228 = por %p226, %p227
    %p229 = scmp.ne.s32.totalorder %s221, %s223
    %p230 = scmp.eq.s32.totalorder %s24, 1
    %p231 = por %p229, %p230
    %p232 = scmp.ne.s32.totalorder %s223, %s224
    %p233 = scmp.eq.s32.totalorder %s24, 0
    %p234 = por %p232, %p233
    %p235 = scmp.ne.s32.totalorder %s223, %s224
    %p236 = scmp.eq.s32.totalorder %s25, 1
    %p237 = por %p235, %p236
    %p239 = scmp.ne.s32.totalorder %s224, %s238
    %p240 = scmp.eq.s32.totalorder %s25, 0
    %p241 = por %p239, %p240
    %s243 = sadd.s32 %s242, 1
    %p246 = scmp.eq.s32.totalorder %s19, 1
    %p247 = scmp.ne.s32.totalorder %s242, %s244
    %p248 = scmp.eq.s32.totalorder %s19, 0
    %p249 = por %p247, %p248
    %p250 = scmp.ne.s32.totalorder %s242, %s244
    %p251 = scmp.eq.s32.totalorder %s24, 1
    %p252 = por %p250, %p251
    %p253 = scmp.ne.s32.totalorder %s244, %s245
    %p254 = scmp.eq.s32.totalorder %s24, 0
    %p255 = por %p253, %p254
    %p256 = scmp.ne.s32.totalorder %s244, %s245
    %p257 = scmp.eq.s32.totalorder %s25, 1
    %p258 = por %p256, %p257
    %p260 = scmp.ne.s32.totalorder %s245, %s259
    %p261 = scmp.eq.s32.totalorder %s25, 0
    %p262 = por %p260, %p261
    %s264 = sadd.s32 %s263, 1
    %p267 = scmp.eq.s32.totalorder %s19, 1
    %p268 = scmp.ne.s32.totalorder %s263, %s265
    %p269 = scmp.eq.s32.totalorder %s19, 0
    %p270 = por %p268, %p269
    %p271 = scmp.ne.s32.totalorder %s263, %s265
    %p272 = scmp.eq.s32.totalorder %s24, 1
    %p273 = por %p271, %p272
    %p274 = scmp.ne.s32.totalorder %s265, %s266
    %p275 = scmp.eq.s32.totalorder %s24, 0
    %p276 = por %p274, %p275
    %p277 = scmp.ne.s32.totalorder %s265, %s266
    %p278 = scmp.eq.s32.totalorder %s25, 1
    %p279 = por %p277, %p278
    %p281 = scmp.ne.s32.totalorder %s266, %s280
    %p282 = scmp.eq.s32.totalorder %s25, 0
    %p283 = por %p281, %p282
    %s285 = sadd.s32 %s284, 1
    %p288 = scmp.eq.s32.totalorder %s19, 1
    %p289 = scmp.ne.s32.totalorder %s284, %s286
    %p290 = scmp.eq.s32.totalorder %s19, 0
    %p291 = por %p289, %p290
    %p292 = scmp.ne.s32.totalorder %s284, %s286
    %p293 = scmp.eq.s32.totalorder %s24, 1
    %p294 = por %p292, %p293
    %p295 = scmp.ne.s32.totalorder %s286, %s287
    %p296 = scmp.eq.s32.totalorder %s24, 0
    %p297 = por %p295, %p296
    %p298 = scmp.ne.s32.totalorder %s286, %s287
    %p299 = scmp.eq.s32.totalorder %s25, 1
    %p300 = por %p298, %p299
    %p302 = scmp.ne.s32.totalorder %s287, %s301
    %p303 = scmp.eq.s32.totalorder %s25, 0
    %p304 = por %p302, %p303
    %s305 = ssub.s32 %s19, %s26
    %p306 = scmp.eq.s32.totalorder %s305, 0
    %s308 = sadd.s32 %s307, 1
    %s309 = scalar_select %p306, %s307, %s308
    %p312 = pneg %p306
    %p313 = scmp.eq.s32.totalorder %s19, 1
    %p314 = por %p312, %p313
    %p315 = scmp.ne.s32.totalorder %s307, %s310
    %p316 = scmp.eq.s32.totalorder %s19, 0
    %p317 = por %p315, %p316
    %p318 = scmp.ne.s32.totalorder %s307, %s310
    %p319 = scmp.eq.s32.totalorder %s24, 1
    %p320 = por %p318, %p319
    %p321 = scmp.ne.s32.totalorder %s310, %s311
    %p322 = scmp.eq.s32.totalorder %s24, 0
    %p323 = por %p321, %p322
    %p324 = scmp.ne.s32.totalorder %s310, %s311
    %p325 = scmp.eq.s32.totalorder %s25, 1
    %p326 = por %p324, %p325
    %p328 = scmp.ne.s32.totalorder %s311, %s327
    %p329 = scmp.eq.s32.totalorder %s25, 0
    %p330 = por %p328, %p329
    %p331 = scmp.le.s32.totalorder 1, %s19
    %p332 = scmp.lt.s32.totalorder %s19, 3
    %p333 = pnand %p331, %p332
    %p334 = pneg %p333
    // Predicated region
    $region9: #{rhythm_discriminator_forward.3} parent=5 // pred_check
      _
    $region10: #{rhythm_discriminator_forward.3} parent=5 // pred_check_branch
      %336 = sbr.rel (%p333) target = $region12
    $region11: #{rhythm_discriminator_forward.3} parent=5 // pred_region
      %s337 = ssub.s32 %s19, 1
      // Predicated region
      $region13: #{rhythm_discriminator_forward.3} parent=11 // pred_check
        %p338 = pneg %p66
      $region14: #{rhythm_discriminator_forward.3} parent=11 // pred_check_branch
        %340 = sbr.rel (%p338) target = $region16
      $region15: #{rhythm_discriminator_forward.3} parent=11 // pred_region
        _
      $region16: #{rhythm_discriminator_forward.3} parent=11 // pred_fallthru
        _
      // Predicated region
      $region17: #{rhythm_discriminator_forward.3} parent=11 // pred_check
        %p341 = pneg %p87
      $region18: #{rhythm_discriminator_forward.3} parent=11 // pred_check_branch
        %343 = sbr.rel (%p341) target = $region20
      $region19: #{rhythm_discriminator_forward.3} parent=11 // pred_region
        _
      $region20: #{rhythm_discriminator_forward.3} parent=11 // pred_fallthru
        _
      // Predicated region
      $region21: #{rhythm_discriminator_forward.3} parent=11 // pred_check
        %p344 = pneg %p108
      $region22: #{rhythm_discriminator_forward.3} parent=11 // pred_check_branch
        %346 = sbr.rel (%p344) target = $region24
      $region23: #{rhythm_discriminator_forward.3} parent=11 // pred_region
        _
      $region24: #{rhythm_discriminator_forward.3} parent=11 // pred_fallthru
        _
      // Predicated region
      $region25: #{rhythm_discriminator_forward.3} parent=11 // pred_check
        %p347 = pneg %p129
      $region26: #{rhythm_discriminator_forward.3} parent=11 // pred_check_branch
        %349 = sbr.rel (%p347) target = $region28
      $region27: #{rhythm_discriminator_forward.3} parent=11 // pred_region
        _
      $region28: #{rhythm_discriminator_forward.3} parent=11 // pred_fallthru
        _
      // Predicated region
      $region29: #{rhythm_discriminator_forward.3} parent=11 // pred_check
        %p350 = pneg %p150
      $region30: #{rhythm_discriminator_forward.3} parent=11 // pred_check_branch
        %352 = sbr.rel (%p350) target = $region32
      $region31: #{rhythm_discriminator_forward.3} parent=11 // pred_region
        _
      $region32: #{rhythm_discriminator_forward.3} parent=11 // pred_fallthru
        _
      // Predicated region
      $region33: #{rhythm_discriminator_forward.3} parent=11 // pred_check
        %p353 = pneg %p171
      $region34: #{rhythm_discriminator_forward.3} parent=11 // pred_check_branch
        %355 = sbr.rel (%p353) target = $region36
      $region35: #{rhythm_discriminator_forward.3} parent=11 // pred_region
        _
      $region36: #{rhythm_discriminator_forward.3} parent=11 // pred_fallthru
        _
      // Predicated region
      $region37: #{rhythm_discriminator_forward.3} parent=11 // pred_check
        %p356 = pneg %p192
      $region38: #{rhythm_discriminator_forward.3} parent=11 // pred_check_branch
        %358 = sbr.rel (%p356) target = $region40
      $region39: #{rhythm_discriminator_forward.3} parent=11 // pred_region
        _
      $region40: #{rhythm_discriminator_forward.3} parent=11 // pred_fallthru
        _
      // Predicated region
      $region41: #{rhythm_discriminator_forward.3} parent=11 // pred_check
        %p359 = pneg %p213
      $region42: #{rhythm_discriminator_forward.3} parent=11 // pred_check_branch
        %361 = sbr.rel (%p359) target = $region44
      $region43: #{rhythm_discriminator_forward.3} parent=11 // pred_region
        _
      $region44: #{rhythm_discriminator_forward.3} parent=11 // pred_fallthru
        _
      // Predicated region
      $region45: #{rhythm_discriminator_forward.3} parent=11 // pred_check
        %p362 = pneg %p234
      $region46: #{rhythm_discriminator_forward.3} parent=11 // pred_check_branch
        %364 = sbr.rel (%p362) target = $region48
      $region47: #{rhythm_discriminator_forward.3} parent=11 // pred_region
        _
      $region48: #{rhythm_discriminator_forward.3} parent=11 // pred_fallthru
        _
      // Predicated region
      $region49: #{rhythm_discriminator_forward.3} parent=11 // pred_check
        %p365 = pneg %p255
      $region50: #{rhythm_discriminator_forward.3} parent=11 // pred_check_branch
        %367 = sbr.rel (%p365) target = $region52
      $region51: #{rhythm_discriminator_forward.3} parent=11 // pred_region
        _
      $region52: #{rhythm_discriminator_forward.3} parent=11 // pred_fallthru
        _
      // Predicated region
      $region53: #{rhythm_discriminator_forward.3} parent=11 // pred_check
        %p368 = pneg %p276
      $region54: #{rhythm_discriminator_forward.3} parent=11 // pred_check_branch
        %370 = sbr.rel (%p368) target = $region56
      $region55: #{rhythm_discriminator_forward.3} parent=11 // pred_region
        _
      $region56: #{rhythm_discriminator_forward.3} parent=11 // pred_fallthru
        _
      // Predicated region
      $region57: #{rhythm_discriminator_forward.3} parent=11 // pred_check
        %p371 = pneg %p297
      $region58: #{rhythm_discriminator_forward.3} parent=11 // pred_check_branch
        %373 = sbr.rel (%p371) target = $region60
      $region59: #{rhythm_discriminator_forward.3} parent=11 // pred_region
        _
      $region60: #{rhythm_discriminator_forward.3} parent=11 // pred_fallthru
        _
    $region12: #{rhythm_discriminator_forward.3} parent=5 // pred_fallthru
      _
    %p374 = scmp.lt.s32.totalorder %s19, 2
    // Predicated region
    $region61: #{rhythm_discriminator_forward.3} parent=5 // pred_check
      %p375 = pneg %p374
    $region62: #{rhythm_discriminator_forward.3} parent=5 // pred_check_branch
      %377 = sbr.rel (%p375) target = $region64
    $region63: #{rhythm_discriminator_forward.3} parent=5 // pred_region
      // Predicated region
      $region65: #{rhythm_discriminator_forward.3} parent=63 // pred_check
        %p378 = pneg %p39
      $region66: #{rhythm_discriminator_forward.3} parent=63 // pred_check_branch
        %380 = sbr.rel (%p378) target = $region68
      $region67: #{rhythm_discriminator_forward.3} parent=63 // pred_region
        %p381 = scmp.lt.s32.totalorder %s19, 1
        %s382 = scalar_select %p381, %s19, 1
        %s383 = smul.addr %s382, 8
        %s384 = scalar_lea.vmem %s0, %s383
      $region68: #{rhythm_discriminator_forward.3} parent=63 // pred_fallthru
        _
    $region64: #{rhythm_discriminator_forward.3} parent=5 // pred_fallthru
      _
    %p385 = scmp.le.s32.totalorder 1, %s19
    %p386 = scmp.lt.s32.totalorder %s19, 3
    %p387 = pnand %p385, %p386
    %p388 = pneg %p387
    // Predicated region
    $region69: #{rhythm_discriminator_forward.3} parent=5 // pred_check
      _
    $region70: #{rhythm_discriminator_forward.3} parent=5 // pred_check_branch
      %390 = sbr.rel (%p387) target = $region72
    $region71: #{rhythm_discriminator_forward.3} parent=5 // pred_region
      %s391 = ssub.s32 %s19, 1
      %p392 = scmp.lt.s32.totalorder %s24, 1
      %s393 = scalar_select %p392, %s24, 1
      %s394 = smul.addr %s393, 8
      %s395 = scalar_lea.vmem %s0, %s394
      %p396 = pneg %p45
      %p397 = pneg %p42
      %p398 = pneg %p66
      %p399 = pneg %p63
      %p400 = pneg %p87
      %p401 = pneg %p84
      %p402 = pneg %p108
      %p403 = pneg %p105
      %p404 = pneg %p129
      %p405 = pneg %p126
      %p406 = pneg %p150
      %p407 = pneg %p147
      %p408 = pneg %p171
      %p409 = pneg %p168
      %p410 = pneg %p192
      %p411 = pneg %p189
      %p412 = pneg %p213
      %p413 = pneg %p210
      %p414 = pneg %p234
      %p415 = pneg %p231
      %p416 = pneg %p255
      %p417 = pneg %p252
      %p418 = pneg %p276
      %p419 = pneg %p273
      %p420 = pneg %p297
      %p421 = pneg %p294
      %p422 = pneg %p323
      %p423 = pneg %p320
      %p424 = scmp.lt.s32.totalorder %s24, 1
      %s425 = scalar_select %p424, %s24, 1
      %s426 = smul.addr %s425, 8
      %s427 = scalar_lea.vmem %s13, %s426
      %p428 = scmp.lt.s32.totalorder %s24, 1
      %s429 = scalar_select %p428, %s24, 1
      %s430 = smul.addr %s429, 8
      %s431 = scalar_lea.vmem %s0, %s430
      %p432 = scmp.lt.s32.totalorder %s24, 1
      %s433 = scalar_select %p432, %s24, 1
      %s434 = smul.addr %s433, 8
      %s435 = scalar_lea.vmem %s13, %s434
      %v437 = vld [vmem:[%s431] sm:$0xff]
      %v438 = vpack.c.bf16 %v437, %v437
      %v439 = vld [vmem:[%s1] sm:$0xf]
      %v440 = vld [vmem:[%s1 + $0x4] sm:$0xf]
      %v441 = vld [vmem:[%s1 + $0x8] sm:$0xf]
      %v442 = vld [vmem:[%s1 + $0xc] sm:$0xf]
      %v443 = vld [vmem:[%s2] sm:$0x1]
      %v445 = vperm.slane %v443, 0
      %v451 = vunpack.c.l.b16 %v439
      %v452 = vunpack.c.l.b16 %v440
      %v453 = vunpack.c.l.b16 %v441
      %v454 = vunpack.c.l.b16 %v442
      %v455 = vpack.c.b16 %v452, %v451
      %v456 = vpack.c.b16 %v454, %v453
      %vm459 = vcmask 261120
      %v461 = vsel %vm459, %v438, 0
      %463 = vmatpush.bf16.msra.mxu0 0
      %464 = vmatpush.bf16.msra.mxu0 0
      %465 = vmatpush.bf16.msra.mxu0 0
      %466 = vmatpush.bf16.msra.mxu0 0
      %467 = vmatpush.bf16.msra.mxu0 0
      %468 = vmatpush.bf16.msra.mxu0 0
      %469 = vmatpush.bf16.msra.mxu0 %v456
      %470 = vmatpush.bf16.msra.mxu0 %v455
      %471 = vmatmul.bf16.gmra.mxu0 %v461
      %v472 = vpop.f32.mrf.mxu0
      %v473 = vadd.f32 %v445, %v472
      %v474 = vpop.f32.mrf.mxu0
      %475 = vdwg.mxu0
      %v476 = vpack.c.bf16 %v473, %v473
      %478 = vrot.lane.b32.xlu0 %v476, 96
      %v479 = vpop.permute.xlu0 %478
      %vm480 = vcmask 64512
      %v482 = vsel %vm480, %v476, 0
      %v485 = vsel %vm480, %v479, 0
      %487 = vmatpush.bf16.xpose.msra.mxu0 0
      %488 = vmatpush.bf16.xpose.msra.mxu0 0
      %489 = vmatpush.bf16.xpose.msra.mxu0 0
      %490 = vmatpush.bf16.xpose.msra.mxu0 0
      %491 = vmatpush.bf16.xpose.msra.mxu0 0
      %492 = vmatpush.bf16.xpose.msra.mxu0 0
      %493 = vmatpush.bf16.xpose.msra.mxu0 0
      %494 = vmatpush.bf16.xpose.msra.mxu0 %v485
      %495 = vmatmul.bf16.gmra.mxu0 %v482
      %v496 = vpop.f32.mrf.mxu0
      %v497 = vadd.f32 0.0, %v496
      %v498 = vpop.f32.mrf.mxu0
      %499 = vdwg.mxu0
      %v500 = vmul.f32 %v497, 0.35355338
      %v501 = vsel %vm480, %v500, -inf
      %502 = vmax.xlane.f32.xlu0 %v501
      %v503 = vpop.xlane.xlu0 %502
      %v504 = vsub.f32 %v500, %v503
      %v505 = vmul.f32 %v504, 1.442695
      %v506 = vpow.pop %v505
      %v507 = vsel %vm480, %v506, 0.0
      %508 = vadd.xlane.f32.xlu0 %v507
      %v509 = vpop.xlane.xlu0 %508
      %v510 = vrcp.pop %v509
      %v511 = vmul.f32 %v509, %v510
      %v512 = vsub.f32 1.0, %v511
      %v513 = vmul.f32 %v510, %v512
      %v514 = vadd.f32 %v510, %v513
      %vm515 = vweird.f32 %v509
      %vm516 = vweird.f32 %v510
      %vm517 = vmor %vm515, %vm516
      %v518 = vsel %vm517, %v510, %v514
      %v519 = vand.u32 2147483647, %v509
      %vm520 = vcmp.eq.f32.partialorder %v519, 8.507059e+37
      %v521 = vand.u32 %v509, 2147483648
      %v522 = vor.u32 1.1754944e-38, %v521
      %v523 = vsel %vm520, %v522, %v518
      %v524 = vmul.f32 %v506, %v523
      %v525 = vpack.c.bf16 %v524, %v524
      %526 = vrot.lane.b32.xlu0 %v476, 64
      %v527 = vpop.permute.xlu0 %526
      %v529 = vsel %vm480, %v525, 0
      %vm531 = vcmask 1043456
      %v533 = vsel %vm531, %v527, 0
      %535 = vmatpush.bf16.msra.mxu0 0
      %536 = vmatpush.bf16.msra.mxu0 0
      %537 = vmatpush.bf16.msra.mxu0 0
      %538 = vmatpush.bf16.msra.mxu0 0
      %539 = vmatpush.bf16.msra.mxu0 0
      %540 = vmatpush.bf16.msra.mxu0 0
      %541 = vmatpush.bf16.msra.mxu0 0
      %542 = vmatpush.bf16.msra.mxu0 %v533
      %543 = vmatmul.bf16.gmra.mxu0 %v529
      %v544 = vpop.f32.mrf.mxu0
      %v545 = vadd.f32 0.0, %v544
      %v546 = vpop.f32.mrf.mxu0
      %547 = vdwg.mxu0
      %v548 = vpack.c.bf16 %v545, %v545
      %vm549 = vcmask 60416
      %550 = vst.msk [vmem:[#allocation2] sm:$0xf] %vm549, %v548
      %551 = vrot.lane.b32.xlu0 %v476, 120
      %v552 = vpop.permute.xlu0 %551
      %553 = vrot.lane.b32.xlu0 %v476, 88
      %v554 = vpop.permute.xlu0 %553
      %v556 = vsel %vm480, %v552, 0
      %v559 = vsel %vm480, %v554, 0
      %561 = vmatpush.bf16.xpose.msra.mxu0 0
      %562 = vmatpush.bf16.xpose.msra.mxu0 0
      %563 = vmatpush.bf16.xpose.msra.mxu0 0
      %564 = vmatpush.bf16.xpose.msra.mxu0 0
      %565 = vmatpush.bf16.xpose.msra.mxu0 0
      %566 = vmatpush.bf16.xpose.msra.mxu0 0
      %567 = vmatpush.bf16.xpose.msra.mxu0 0
      %568 = vmatpush.bf16.xpose.msra.mxu0 %v559
      %569 = vmatmul.bf16.gmra.mxu0 %v556
      %v570 = vpop.f32.mrf.mxu0
      %v571 = vadd.f32 0.0, %v570
      %v572 = vpop.f32.mrf.mxu0
      %573 = vdwg.mxu0
      %v574 = vmul.f32 %v571, 0.35355338
      %v575 = vsel %vm480, %v574, -inf
      %576 = vmax.xlane.f32.xlu0 %v575
      %v577 = vpop.xlane.xlu0 %576
      %v578 = vsub.f32 %v574, %v577
      %v579 = vmul.f32 %v578, 1.442695
      %v580 = vpow.pop %v579
      %v581 = vsel %vm480, %v580, 0.0
      %582 = vadd.xlane.f32.xlu0 %v581
      %v583 = vpop.xlane.xlu0 %582
      %v584 = vrcp.pop %v583
      %v585 = vmul.f32 %v583, %v584
      %v586 = vsub.f32 1.0, %v585
      %v587 = vmul.f32 %v584, %v586
      %v588 = vadd.f32 %v584, %v587
      %vm589 = vweird.f32 %v583
      %vm590 = vweird.f32 %v584
      %vm591 = vmor %vm589, %vm590
      %v592 = vsel %vm591, %v584, %v588
      %v593 = vand.u32 2147483647, %v583
      %vm594 = vcmp.eq.f32.partialorder %v593, 8.507059e+37
      %v595 = vand.u32 %v583, 2147483648
      %v596 = vor.u32 1.1754944e-38, %v595
      %v597 = vsel %vm594, %v596, %v592
      %v598 = vmul.f32 %v580, %v597
      %v599 = vpack.c.bf16 %v598, %v598
      %600 = vrot.lane.b32.xlu0 %v476, 56
      %v601 = vpop.permute.xlu0 %600
      %v603 = vsel %vm480, %v599, 0
      %v606 = vsel %vm531, %v601, 0
      %608 = vmatpush.bf16.msra.mxu0 0
      %609 = vmatpush.bf16.msra.mxu0 0
      %610 = vmatpush.bf16.msra.mxu0 0
      %611 = vmatpush.bf16.msra.mxu0 0
      %612 = vmatpush.bf16.msra.mxu0 0
      %613 = vmatpush.bf16.msra.mxu0 0
      %614 = vmatpush.bf16.msra.mxu0 0
      %615 = vmatpush.bf16.msra.mxu0 %v606
      %616 = vmatmul.bf16.gmra.mxu0 %v603
      %v617 = vpop.f32.mrf.mxu0
      %v618 = vadd.f32 0.0, %v617
      %v619 = vpop.f32.mrf.mxu0
      %620 = vdwg.mxu0
      %v621 = vpack.c.bf16 %v618, %v618
      %623 = vrot.lane.b32.xlu0 %v621, 8
      %v624 = vpop.permute.xlu0 %623
      %vm626 = vcmask 126016
      %627 = vst.msk [vmem:[#allocation2] sm:$0xf] %vm626, %v624
      %628 = vrot.lane.b32.xlu0 %v476, 112
      %v629 = vpop.permute.xlu0 %628
      %630 = vrot.lane.b32.xlu0 %v476, 80
      %v631 = vpop.permute.xlu0 %630
      %v633 = vsel %vm480, %v629, 0
      %v636 = vsel %vm480, %v631, 0
      %638 = vmatpush.bf16.xpose.msra.mxu0 0
      %639 = vmatpush.bf16.xpose.msra.mxu0 0
      %640 = vmatpush.bf16.xpose.msra.mxu0 0
      %641 = vmatpush.bf16.xpose.msra.mxu0 0
      %642 = vmatpush.bf16.xpose.msra.mxu0 0
      %643 = vmatpush.bf16.xpose.msra.mxu0 0
      %644 = vmatpush.bf16.xpose.msra.mxu0 0
      %645 = vmatpush.bf16.xpose.msra.mxu0 %v636
      %646 = vmatmul.bf16.gmra.mxu0 %v633
      %v647 = vpop.f32.mrf.mxu0
      %v648 = vadd.f32 0.0, %v647
      %v649 = vpop.f32.mrf.mxu0
      %650 = vdwg.mxu0
      %v651 = vmul.f32 %v648, 0.35355338
      %v652 = vsel %vm480, %v651, -inf
      %653 = vmax.xlane.f32.xlu0 %v652
      %v654 = vpop.xlane.xlu0 %653
      %v655 = vsub.f32 %v651, %v654
      %v656 = vmul.f32 %v655, 1.442695
      %v657 = vpow.pop %v656
      %v658 = vsel %vm480, %v657, 0.0
      %659 = vadd.xlane.f32.xlu0 %v658
      %v660 = vpop.xlane.xlu0 %659
      %v661 = vrcp.pop %v660
      %v662 = vmul.f32 %v660, %v661
      %v663 = vsub.f32 1.0, %v662
      %v664 = vmul.f32 %v661, %v663
      %v665 = vadd.f32 %v661, %v664
      %vm666 = vweird.f32 %v660
      %vm667 = vweird.f32 %v661
      %vm668 = vmor %vm666, %vm667
      %v669 = vsel %vm668, %v661, %v665
      %v670 = vand.u32 2147483647, %v660
      %vm671 = vcmp.eq.f32.partialorder %v670, 8.507059e+37
      %v672 = vand.u32 %v660, 2147483648
      %v673 = vor.u32 1.1754944e-38, %v672
      %v674 = vsel %vm671, %v673, %v669
      %v675 = vmul.f32 %v657, %v674
      %v676 = vpack.c.bf16 %v675, %v675
      %677 = vrot.lane.b32.xlu0 %v476, 48
      %v678 = vpop.permute.xlu0 %677
      %v680 = vsel %vm480, %v676, 0
      %v683 = vsel %vm531, %v678, 0
      %685 = vmatpush.bf16.msra.mxu0 0
      %686 = vmatpush.bf16.msra.mxu0 0
      %687 = vmatpush.bf16.msra.mxu0 0
      %688 = vmatpush.bf16.msra.mxu0 0
      %689 = vmatpush.bf16.msra.mxu0 0
      %690 = vmatpush.bf16.msra.mxu0 0
      %691 = vmatpush.bf16.msra.mxu0 0
      %692 = vmatpush.bf16.msra.mxu0 %v683
      %693 = vmatmul.bf16.gmra.mxu0 %v680
      %v694 = vpop.f32.mrf.mxu0
      %v695 = vadd.f32 0.0, %v694
      %v696 = vpop.f32.mrf.mxu0
      %697 = vdwg.mxu0
      %v698 = vpack.c.bf16 %v695, %v695
      %700 = vrot.lane.b32.xlu0 %v698, 16
      %v701 = vpop.permute.xlu0 %700
      %vm703 = vcmask 191616
      %704 = vst.msk [vmem:[#allocation2] sm:$0xf] %vm703, %v701
      %705 = vrot.lane.b32.xlu0 %v476, 104
      %v706 = vpop.permute.xlu0 %705
      %707 = vrot.lane.b32.xlu0 %v476, 72
      %v708 = vpop.permute.xlu0 %707
      %v710 = vsel %vm480, %v706, 0
      %v713 = vsel %vm480, %v708, 0
      %715 = vmatpush.bf16.xpose.msra.mxu0 0
      %716 = vmatpush.bf16.xpose.msra.mxu0 0
      %717 = vmatpush.bf16.xpose.msra.mxu0 0
      %718 = vmatpush.bf16.xpose.msra.mxu0 0
      %719 = vmatpush.bf16.xpose.msra.mxu0 0
      %720 = vmatpush.bf16.xpose.msra.mxu0 0
      %721 = vmatpush.bf16.xpose.msra.mxu0 0
      %722 = vmatpush.bf16.xpose.msra.mxu0 %v713
      %723 = vmatmul.bf16.gmra.mxu0 %v710
      %v724 = vpop.f32.mrf.mxu0
      %v725 = vadd.f32 0.0, %v724
      %v726 = vpop.f32.mrf.mxu0
      %727 = vdwg.mxu0
      %v728 = vmul.f32 %v725, 0.35355338
      %v729 = vsel %vm480, %v728, -inf
      %730 = vmax.xlane.f32.xlu0 %v729
      %v731 = vpop.xlane.xlu0 %730
      %v732 = vsub.f32 %v728, %v731
      %v733 = vmul.f32 %v732, 1.442695
      %v734 = vpow.pop %v733
      %v735 = vsel %vm480, %v734, 0.0
      %736 = vadd.xlane.f32.xlu0 %v735
      %v737 = vpop.xlane.xlu0 %736
      %v738 = vrcp.pop %v737
      %v739 = vmul.f32 %v737, %v738
      %v740 = vsub.f32 1.0, %v739
      %v741 = vmul.f32 %v738, %v740
      %v742 = vadd.f32 %v738, %v741
      %vm743 = vweird.f32 %v737
      %vm744 = vweird.f32 %v738
      %vm745 = vmor %vm743, %vm744
      %v746 = vsel %vm745, %v738, %v742
      %v747 = vand.u32 2147483647, %v737
      %vm748 = vcmp.eq.f32.partialorder %v747, 8.507059e+37
      %v749 = vand.u32 %v737, 2147483648
      %v750 = vor.u32 1.1754944e-38, %v749
      %v751 = vsel %vm748, %v750, %v746
      %v752 = vmul.f32 %v734, %v751
      %v753 = vpack.c.bf16 %v752, %v752
      %754 = vrot.lane.b32.xlu0 %v476, 40
      %v755 = vpop.permute.xlu0 %754
      %v757 = vsel %vm480, %v753, 0
      %v760 = vsel %vm531, %v755, 0
      %762 = vmatpush.bf16.msra.mxu0 0
      %763 = vmatpush.bf16.msra.mxu0 0
      %764 = vmatpush.bf16.msra.mxu0 0
      %765 = vmatpush.bf16.msra.mxu0 0
      %766 = vmatpush.bf16.msra.mxu0 0
      %767 = vmatpush.bf16.msra.mxu0 0
      %768 = vmatpush.bf16.msra.mxu0 0
      %769 = vmatpush.bf16.msra.mxu0 %v760
      %770 = vmatmul.bf16.gmra.mxu0 %v757
      %v771 = vpop.f32.mrf.mxu0
      %v772 = vadd.f32 0.0, %v771
      %v773 = vpop.f32.mrf.mxu0
      %774 = vdwg.mxu0
      %v775 = vpack.c.bf16 %v772, %v772
      %777 = vrot.lane.b32.xlu0 %v775, 24
      %v778 = vpop.permute.xlu0 %777
      %vm780 = vcmask 257216
      %781 = vst.msk [vmem:[#allocation2] sm:$0xf] %vm780, %v778
      %v782 = vld [vmem:[#allocation2] sm:$0xf]
      %v783 = vld [vmem:[%s3] sm:$0xf]
      %v784 = vld [vmem:[%s3 + $0x4] sm:$0xf]
      %v785 = vld [vmem:[%s3 + $0x8] sm:$0xf]
      %v786 = vld [vmem:[%s3 + $0xc] sm:$0xf]
      %v787 = vld [vmem:[%s4] sm:$0x1]
      %v789 = vperm.slane %v787, 0
      %v795 = vunpack.c.l.b16 %v783
      %v796 = vunpack.c.l.b16 %v784
      %v797 = vunpack.c.l.b16 %v785
      %v798 = vunpack.c.l.b16 %v786
      %v799 = vpack.c.b16 %v796, %v795
      %v800 = vpack.c.b16 %v798, %v797
      %v804 = vsel %vm459, %v782, 0
      %806 = vmatpush.bf16.msra.mxu0 0
      %807 = vmatpush.bf16.msra.mxu0 0
      %808 = vmatpush.bf16.msra.mxu0 0
      %809 = vmatpush.bf16.msra.mxu0 0
      %810 = vmatpush.bf16.msra.mxu0 0
      %811 = vmatpush.bf16.msra.mxu0 0
      %812 = vmatpush.bf16.msra.mxu0 %v800
      %813 = vmatpush.bf16.msra.mxu0 %v799
      %814 = vmatmul.bf16.gmra.mxu0 %v804
      %v815 = vpop.f32.mrf.mxu0
      %v816 = vadd.f32 %v789, %v815
      %v817 = vpop.f32.mrf.mxu0
      %818 = vdwg.mxu0
      %v819 = vadd.f32 %v816, %v437
      %v820 = vld [vmem:[%s5] sm:$0x1]
      %v821 = vld [vmem:[%s6] sm:$0x1]
      %v822 = vsel %vm459, %v819, 0.0
      %823 = vadd.xlane.f32.xlu0 %v822
      %v824 = vpop.xlane.xlu0 %823
      %v825 = vrcp.pop 32.0
      %v826 = vmul.f32 32.0, %v825
      %v827 = vsub.f32 1.0, %v826
      %v828 = vmul.f32 %v825, %v827
      %v829 = vadd.f32 %v825, %v828
      %vm830 = vweird.f32 %v825
      %v831 = vsel %vm830, %v825, %v829
      %v832 = vmul.f32 %v824, %v831
      %v833 = vsub.f32 %v819, %v832
      %v834 = vmul.f32 %v833, %v833
      %v835 = vsel %vm459, %v834, 0.0
      %836 = vadd.xlane.f32.xlu0 %v835
      %v837 = vpop.xlane.xlu0 %836
      %v838 = vmul.f32 %v837, %v831
      %v839 = vadd.f32 %v838, 1e-05
      %v840 = vrsqrt.pop %v839
      %v841 = vmul.f32 %v840, %v839
      %v842 = vmul.f32 %v841, %v840
      %v843 = vmul.f32 0.5, %v842
      %v844 = vsub.f32 1.5, %v843
      %v845 = vmul.f32 %v840, %v844
      %vm846 = vweird.f32 %v839
      %vm847 = vweird.f32 %v840
      %vm848 = vmor %vm846, %vm847
      %v849 = vsel %vm848, %v840, %v845
      %v850 = vmul.f32 %v833, %v849
      %v852 = vperm.slane %v820, 0
      %v854 = vmul.f32 %v850, %v852
      %v856 = vperm.slane %v821, 0
      %v858 = vadd.f32 %v854, %v856
      %v859 = vpack.c.bf16 %v858, %v858
      %v860 = vld [vmem:[%s7] sm:$0xf]
      %v861 = vld [vmem:[%s7 + $0x4] sm:$0xf]
      %v862 = vld [vmem:[%s7 + $0x8] sm:$0xf]
      %v863 = vld [vmem:[%s7 + $0xc] sm:$0xf]
      %v864 = vld [vmem:[%s8] sm:$0x1]
      %v866 = vperm.slane %v864, 0
      %v872 = vunpack.c.l.b16 %v860
      %v873 = vunpack.c.l.b16 %v861
      %v874 = vunpack.c.l.b16 %v862
      %v875 = vunpack.c.l.b16 %v863
      %v876 = vpack.c.b16 %v873, %v872
      %v877 = vpack.c.b16 %v875, %v874
      %v881 = vsel %vm459, %v859, 0
      %883 = vmatpush.bf16.msra.mxu0 0
      %884 = vmatpush.bf16.msra.mxu0 0
      %885 = vmatpush.bf16.msra.mxu0 0
      %886 = vmatpush.bf16.msra.mxu0 0
      %887 = vmatpush.bf16.msra.mxu0 0
      %888 = vmatpush.bf16.msra.mxu0 0
      %889 = vmatpush.bf16.msra.mxu0 %v877
      %890 = vmatpush.bf16.msra.mxu0 %v876
      %891 = vmatmul.bf16.gmra.mxu0 %v881
      %v892 = vpop.f32.mrf.mxu0
      %v893 = vadd.f32 %v866, %v892
      %v894 = vpop.f32.mrf.mxu0
      %895 = vdwg.mxu0
      %v896 = vmax.f32 %v893, 0.0
      %v897 = vpack.c.bf16 %v896, %v896
      %v898 = vld [vmem:[%s9] sm:$0xf]
      %v899 = vld [vmem:[%s9 + $0x4] sm:$0xf]
      %v900 = vld [vmem:[%s9 + $0x8] sm:$0xf]
      %v901 = vld [vmem:[%s9 + $0xc] sm:$0xf]
      %v902 = vld [vmem:[%s9 + $0x10] sm:$0xf]
      %v903 = vld [vmem:[%s9 + $0x14] sm:$0xf]
      %v904 = vld [vmem:[%s9 + $0x18] sm:$0xf]
      %v905 = vld [vmem:[%s9 + $0x1c] sm:$0xf]
      %v906 = vld [vmem:[%s10] sm:$0x1]
      %v908 = vperm.slane %v906, 0
      %v918 = vunpack.c.l.b16 %v898
      %v919 = vunpack.c.l.b16 %v899
      %v920 = vunpack.c.l.b16 %v900
      %v921 = vunpack.c.l.b16 %v901
      %v922 = vunpack.c.l.b16 %v902
      %v923 = vunpack.c.l.b16 %v903
      %v924 = vunpack.c.l.b16 %v904
      %v925 = vunpack.c.l.b16 %v905
      %v926 = vpack.c.b16 %v919, %v918
      %v927 = vpack.c.b16 %v921, %v920
      %v928 = vpack.c.b16 %v923, %v922
      %v929 = vpack.c.b16 %v925, %v924
      %vm934 = vcmask 523264
      %v936 = vsel %vm934, %v897, 0
      %938 = vmatpush.bf16.msra.mxu0 0
      %939 = vmatpush.bf16.msra.mxu0 0
      %940 = vmatpush.bf16.msra.mxu0 0
      %941 = vmatpush.bf16.msra.mxu0 0
      %942 = vmatpush.bf16.msra.mxu0 %v929
      %943 = vmatpush.bf16.msra.mxu0 %v928
      %944 = vmatpush.bf16.msra.mxu0 %v927
      %945 = vmatpush.bf16.msra.mxu0 %v926
      %946 = vmatmul.bf16.gmra.mxu0 %v936
      %v947 = vpop.f32.mrf.mxu0
      %v948 = vadd.f32 %v908, %v947
      %v949 = vpop.f32.mrf.mxu0
      %950 = vdwg.mxu0
      %v951 = vadd.f32 %v948, %v858
      %v952 = vld [vmem:[%s11] sm:$0x1]
      %v953 = vld [vmem:[%s12] sm:$0x1]
      %v954 = vsel %vm459, %v951, 0.0
      %955 = vadd.xlane.f32.xlu0 %v954
      %v956 = vpop.xlane.xlu0 %955
      %v957 = vmul.f32 %v956, %v831
      %v958 = vsub.f32 %v951, %v957
      %v959 = vmul.f32 %v958, %v958
      %v960 = vsel %vm459, %v959, 0.0
      %961 = vadd.xlane.f32.xlu0 %v960
      %v962 = vpop.xlane.xlu0 %961
      %v963 = vmul.f32 %v962, %v831
      %v964 = vadd.f32 %v963, 1e-05
      %v965 = vrsqrt.pop %v964
      %v966 = vmul.f32 %v965, %v964
      %v967 = vmul.f32 %v966, %v965
      %v968 = vmul.f32 0.5, %v967
      %v969 = vsub.f32 1.5, %v968
      %v970 = vmul.f32 %v965, %v969
      %vm971 = vweird.f32 %v964
      %vm972 = vweird.f32 %v965
      %vm973 = vmor %vm971, %vm972
      %v974 = vsel %vm973, %v965, %v970
      %v975 = vmul.f32 %v958, %v974
      %v977 = vperm.slane %v952, 0
      %v979 = vmul.f32 %v975, %v977
      %v981 = vperm.slane %v953, 0
      %v983 = vadd.f32 %v979, %v981
      %984 = vst.msk [vmem:[%s435] sm:$0xff] %vm459, %v983
      %p985 = scmp.lt.s32.totalorder %s24, 1
      %s986 = scalar_select %p985, %s24, 1
      %s987 = smul.addr %s986, 8
      %s988 = scalar_lea.vmem %s13, %s987
      // Predicated region
      $region73: #{rhythm_discriminator_forward.3} parent=71 // pred_check
        %p989 = pneg %p320
      $region74: #{rhythm_discriminator_forward.3} parent=71 // pred_check_branch
        %991 = sbr.rel (%p989) target = $region76
      $region75: #{rhythm_discriminator_forward.3} parent=71 // pred_region
        _
      $region76: #{rhythm_discriminator_forward.3} parent=71 // pred_fallthru
        _
    $region72: #{rhythm_discriminator_forward.3} parent=5 // pred_fallthru
      _
    %p992 = scmp.le.s32.totalorder 2, %s19
    // Predicated region
    $region77: #{rhythm_discriminator_forward.3} parent=5 // pred_check
      %p993 = pneg %p992
    $region78: #{rhythm_discriminator_forward.3} parent=5 // pred_check_branch
      %995 = sbr.rel (%p993) target = $region80
    $region79: #{rhythm_discriminator_forward.3} parent=5 // pred_region
      %s996 = ssub.s32 %s19, 2
      // Predicated region
      $region81: #{rhythm_discriminator_forward.3} parent=79 // pred_check
        %p997 = pneg %p326
      $region82: #{rhythm_discriminator_forward.3} parent=79 // pred_check_branch
        %999 = sbr.rel (%p997) target = $region84
      $region83: #{rhythm_discriminator_forward.3} parent=79 // pred_region
        %p1000 = scmp.lt.s32.totalorder %s25, 1
        %s1001 = scalar_select %p1000, %s25, 1
        %s1002 = smul.addr %s1001, 8
        %s1003 = scalar_lea.vmem %s13, %s1002
      $region84: #{rhythm_discriminator_forward.3} parent=79 // pred_fallthru
        _
    $region80: #{rhythm_discriminator_forward.3} parent=5 // pred_fallthru
      _
  $region6: #{rhythm_discriminator_forward.3} parent=0 // loop_footer
    %s23 = sadd.s32 1, %s19
  $region7: #{rhythm_discriminator_forward.3} parent=0 // loop_footer_branch
    %18 = sbr.rel target = $region3
  $region8: #{rhythm_discriminator_forward.3} parent=0 // loop_exit
    _

</llo_original>
